<compile_context>
chip_gen: v5e
topology: v5e:2x2
jax: 0.10.0
libtpu: 0.0.40
codegen_flags: <defaults>
</compile_context>

<pallas_src>
import jax
import jax.numpy as jnp
from jax import lax
from jax.experimental import pallas as pl
from jax.experimental.pallas import tpu as pltpu

SEQ_LEN = 15            # implied by nn.Linear(15 * 2, 2)
LSTM_HIDDEN = 2         # nn.LSTM(hidden_dim, 2) -> hidden_size = 2
NUM_GATES = 4           # i, f, g, o (PyTorch gate order)
GATES_DIM = NUM_GATES * LSTM_HIDDEN
TAG_OUT = 2             # nn.Linear(30, 2)
# Packed-parameter buffer row layout (all rows are GATES_DIM=8 wide):
#   [0, H)          : weight_ih_l0.T                  (H, 8)
#   [H, H+1)        : bias_ih_l0 + bias_hh_l0         (1, 8)
#   [H+1, H+3)      : weight_hh_l0.T                  (2, 8)
#   [H+3, H+18)     : hidden2tag.weight.T, row t = [w00 w01 w10 w11 0 0 0 0]
#   [H+18, H+19)    : hidden2tag.bias padded to 8
PACKED_EXTRA_ROWS = 1 + LSTM_HIDDEN + SEQ_LEN + 1


def lstm_tagger_kernel(x_ref, p_ref, o_ref, gx_ref):
    # x_ref:  (B*SEQ_LEN, H) batch-major rows: row = b*SEQ_LEN + t
    # p_ref:  (H + 19, 8)    packed parameters (layout above)
    # o_ref:  (B, TAG_OUT)
    # gx_ref: (B*SEQ_LEN, 8) VMEM scratch holding the hoisted input projection
    batch = o_ref.shape[0]
    hidden = x_ref.shape[1]

    b_row = hidden
    whh_row = hidden + 1
    wout_row = hidden + 1 + LSTM_HIDDEN
    bout_row = wout_row + SEQ_LEN

    # (5) One MXU matmul covers all 15 time steps; bias folded in.  Off the
    # recurrence chain; HIGHEST keeps the f32 contraction exact vs reference.
    gx_ref[...] = (
        jnp.dot(x_ref[...], p_ref[0:hidden, :],
                preferred_element_type=jnp.float32,
                precision=jax.lax.Precision.HIGHEST)
        + p_ref[b_row:b_row + 1, :])

    # Hoist loop-invariant broadcasts (JAX does not CSE broadcast_in_dim).
    whh0 = jnp.broadcast_to(p_ref[whh_row:whh_row + 1, :], (batch, GATES_DIM))
    whh1 = jnp.broadcast_to(p_ref[whh_row + 1:whh_row + 2, :], (batch, GATES_DIM))

    # (3) Per-lane masks: sigmoid(x) = 0.5*tanh(x/2) + 0.5 on i/f/o lanes,
    # plain tanh on the g lanes -> one EUP push for all four gates.
    col = lax.broadcasted_iota(jnp.int32, (batch, GATES_DIM), 1)
    is_g = jnp.logical_and(col >= 2 * LSTM_HIDDEN, col < 3 * LSTM_HIDDEN)
    half = jnp.where(is_g, 1.0, 0.5).astype(jnp.float32)    # pre & post scale
    shift = jnp.where(is_g, 0.0, 0.5).astype(jnp.float32)   # post bias

    h = jnp.zeros((batch, LSTM_HIDDEN), jnp.float32)
    c = jnp.zeros((batch, LSTM_HIDDEN), jnp.float32)
    # (4) hidden2tag bias folded into the output accumulator init.
    acc = jnp.broadcast_to(p_ref[bout_row:bout_row + 1, 0:TAG_OUT],
                           (batch, TAG_OUT))

    # (2) Fully unrolled (static) time loop; live set is just {h, c, acc}.
    # Batch-major gx: step-t rows sit at t, t+SEQ_LEN, ..., t+(B-1)*SEQ_LEN,
    # read with a static strided sublane slice (no wrapper transpose needed).
    for t in range(SEQ_LEN):
        gx_t = gx_ref[pl.ds(t, batch, stride=SEQ_LEN), :]            # (B, 8)
        gates = gx_t + h[:, 0:1] * whh0 + h[:, 1:2] * whh1
        act = jnp.tanh(gates * half) * half + shift                  # i|f|g|o
        i_g = act[:, 0 * LSTM_HIDDEN:1 * LSTM_HIDDEN]
        f_g = act[:, 1 * LSTM_HIDDEN:2 * LSTM_HIDDEN]
        g_g = act[:, 2 * LSTM_HIDDEN:3 * LSTM_HIDDEN]
        o_g = act[:, 3 * LSTM_HIDDEN:4 * LSTM_HIDDEN]
        c = f_g * c + i_g * g_g
        h = o_g * jnp.tanh(c)
        # flatten + hidden2tag folded into per-step FMAs (off the critical
        # path of the recurrence -> hides under the EUP latency).
        w_row = p_ref[pl.ds(wout_row + t, 1), :]        # (1, 8): w00 w01 w10 w11
        acc = acc + h[:, 0:1] * w_row[:, 0:2] + h[:, 1:2] * w_row[:, 2:4]

    o_ref[...] = acc


def lstm_tagger_forward(sentence, packed_params):
    batch, seq_len, hidden_dim = sentence.shape
    assert seq_len == SEQ_LEN
    # Batch-major 2D view (row = b*SEQ_LEN + t): a free reshape — no XLA
    # transpose op; the hoisted matmul is row-order agnostic and the per-step
    # reorder happens in-kernel via the strided slice.
    x2d = sentence.reshape(batch * SEQ_LEN, hidden_dim)
    vmem = pl.BlockSpec(memory_space=pltpu.MemorySpace.VMEM)
    # Everything fits in a few KiB of VMEM on every generation, so a grid-less
    # single-TC call is right at this size.
    # TODO(synk): if batch scales (>~1e4), add a parallel batch grid axis
    # (2 TCs on v7x), flip to a batch-on-lanes layout, and re-derive tiles
    # against v7x's 64 MiB VMEM.
    return pl.pallas_call(
        lstm_tagger_kernel,
        out_shape=jax.ShapeDtypeStruct((batch, TAG_OUT), jnp.float32),
        in_specs=[vmem, vmem],
        out_specs=vmem,
        scratch_shapes=[pltpu.VMEM((batch * SEQ_LEN, GATES_DIM), jnp.float32)],
    )(x2d, packed_params)


def init_params(key, hidden_dim):
    """Deterministic init mirroring nn.LSTM / nn.Linear parameter shapes."""
    ks = jax.random.split(key, 6)
    k_lstm = 1.0 / jnp.sqrt(jnp.float32(LSTM_HIDDEN))
    w_ih = jax.random.uniform(ks[0], (GATES_DIM, hidden_dim),
                              jnp.float32, -k_lstm, k_lstm)           # weight_ih_l0
    w_hh = jax.random.uniform(ks[1], (GATES_DIM, LSTM_HIDDEN),
                              jnp.float32, -k_lstm, k_lstm)           # weight_hh_l0
    b_ih = jax.random.uniform(ks[2], (GATES_DIM,), jnp.float32, -k_lstm, k_lstm)
    b_hh = jax.random.uniform(ks[3], (GATES_DIM,), jnp.float32, -k_lstm, k_lstm)
    k_lin = 1.0 / jnp.sqrt(jnp.float32(SEQ_LEN * LSTM_HIDDEN))
    w_out = jax.random.uniform(ks[4], (TAG_OUT, SEQ_LEN * LSTM_HIDDEN),
                               jnp.float32, -k_lin, k_lin)            # hidden2tag.weight
    b_out = jax.random.uniform(ks[5], (TAG_OUT,), jnp.float32, -k_lin, k_lin)
    return {
        "w_ih": jnp.asarray(w_ih.T),                                  # (H, 8)
        "w_hh": jnp.asarray(w_hh.T),                                  # (2, 8)
        "b": (b_ih + b_hh)[None, :],                                  # (1, 8)
        # hidden2tag.weight.T per time step: [t, j, :] == W.T[2t+j, :]
        "w_out": jnp.asarray(w_out.T).reshape(SEQ_LEN, LSTM_HIDDEN, TAG_OUT),
        "b_out": b_out[None, :],                                      # (1, 2)
    }


def pack_params(params):
    """Pack all parameters into one (H + 19, 8) f32 buffer (one entry DMA)."""
    w_ih = params["w_ih"].astype(jnp.float32)                         # (H, 8)
    b = params["b"].astype(jnp.float32)                               # (1, 8)
    w_hh = params["w_hh"].astype(jnp.float32)                         # (2, 8)
    w_out = params["w_out"].astype(jnp.float32).reshape(
        SEQ_LEN, LSTM_HIDDEN * TAG_OUT)                               # (15, 4)
    w_out = jnp.pad(w_out, ((0, 0), (0, GATES_DIM - LSTM_HIDDEN * TAG_OUT)))
    b_out = jnp.pad(params["b_out"].astype(jnp.float32),
                    ((0, 0), (0, GATES_DIM - TAG_OUT)))               # (1, 8)
    return jnp.concatenate([w_ih, b, w_hh, w_out, b_out], axis=0)


def lstm_tagger_reference(sentence, params):
    """Pure-JAX reference for correctness checking."""
    batch = sentence.shape[0]
    h = jnp.zeros((batch, LSTM_HIDDEN), jnp.float32)
    c = jnp.zeros((batch, LSTM_HIDDEN), jnp.float32)
    hs = []
    for t in range(SEQ_LEN):
        gates = sentence[:, t, :] @ params["w_ih"] + h @ params["w_hh"] + params["b"]
        i_g = jax.nn.sigmoid(gates[:, 0:2])
        f_g = jax.nn.sigmoid(gates[:, 2:4])
        g_g = jnp.tanh(gates[:, 4:6])
        o_g = jax.nn.sigmoid(gates[:, 6:8])
        c = f_g * c + i_g * g_g
        h = o_g * jnp.tanh(c)
        hs.append(h)
    vec = jnp.concatenate(hs, axis=-1)                                # (B, 30)
    w_out_flat = params["w_out"].reshape(SEQ_LEN * LSTM_HIDDEN, TAG_OUT)
    return vec @ w_out_flat + params["b_out"]


if __name__ == "__main__":
    hidden_dim = 32
    batch = 4

    key = jax.random.PRNGKey(0)
    k_x, k_p = jax.random.split(key)
    sentence = jax.random.normal(k_x, (batch, SEQ_LEN, hidden_dim), jnp.float32)
    params = init_params(k_p, hidden_dim)
    packed = pack_params(params)
    assert packed.shape == (hidden_dim + PACKED_EXTRA_ROWS, GATES_DIM)

    out = lstm_tagger_forward(sentence, packed)
    out = jax.block_until_ready(out)

    ref = lstm_tagger_reference(sentence, params)
    assert out.shape == (batch, TAG_OUT)
    assert jnp.allclose(out, ref, atol=1e-5, rtol=1e-5), "mismatch vs reference"

    print("KERNEL_OK")
</pallas_src>

<mosaic_0001>
module attributes {stable_mosaic.version = 11 : i64} {
  func.func @lstm_tagger_kernel(%arg0: memref<60x32xf32, #tpu.memory_space<vmem>>, %arg1: memref<51x8xf32, #tpu.memory_space<vmem>>, %arg2: memref<4x2xf32, #tpu.memory_space<vmem>>, %arg3: memref<60x8xf32, #tpu.memory_space<vmem>>) attributes {dimension_semantics = [], scalar_prefetch = 0 : i64, scratch_operands = 1 : i64, tpu.core_type = #tpu.core_type<tc>} {
    %c0 = arith.constant 0 : index
    %c0_0 = arith.constant 0 : index
    %0 = vector.load %arg0[%c0, %c0_0] : memref<60x32xf32, #tpu.memory_space<vmem>>, vector<60x32xf32>
    %c0_1 = arith.constant 0 : index
    %c0_2 = arith.constant 0 : index
    %1 = vector.load %arg1[%c0_1, %c0_2] : memref<51x8xf32, #tpu.memory_space<vmem>>, vector<32x8xf32>
    %cst = arith.constant dense<0.000000e+00> : vector<60x8xf32>
    %2 = tpu.matmul %0, %1, %cst {dimension_numbers = #tpu.dot_dimension_numbers<[1], [0], [0], [1], [0, 0, 1, 1], [], []>, precision = #tpu.contract_precision<fp32>} : vector<60x32xf32>, vector<32x8xf32>, vector<60x8xf32> -> vector<60x8xf32>
    %c32 = arith.constant 32 : index
    %c0_3 = arith.constant 0 : index
    %3 = vector.load %arg1[%c32, %c0_3] : memref<51x8xf32, #tpu.memory_space<vmem>>, vector<1x8xf32>
    %4 = vector.broadcast %3 : vector<1x8xf32> to vector<60x8xf32>
    %5 = arith.addf %2, %4 : vector<60x8xf32>
    %c0_4 = arith.constant 0 : index
    %c0_5 = arith.constant 0 : index
    %6 = vector.load %arg3[%c0_4, %c0_5] : memref<60x8xf32, #tpu.memory_space<vmem>>, vector<60x8xf32>
    tpu.vector_store %arg3[%c0_4, %c0_5], %5 {strides = array<i32>} : memref<60x8xf32, #tpu.memory_space<vmem>>, vector<60x8xf32>,
    %c33 = arith.constant 33 : index
    %c0_6 = arith.constant 0 : index
    %7 = vector.load %arg1[%c33, %c0_6] : memref<51x8xf32, #tpu.memory_space<vmem>>, vector<1x8xf32>
    %8 = vector.shape_cast %7 : vector<1x8xf32> to vector<1x8xf32>
    %9 = vector.broadcast %8 : vector<1x8xf32> to vector<4x8xf32>
    %c34 = arith.constant 34 : index
    %c0_7 = arith.constant 0 : index
    %10 = vector.load %arg1[%c34, %c0_7] : memref<51x8xf32, #tpu.memory_space<vmem>>, vector<1x8xf32>
    %11 = vector.shape_cast %10 : vector<1x8xf32> to vector<1x8xf32>
    %12 = vector.broadcast %11 : vector<1x8xf32> to vector<4x8xf32>
    %13 = tpu.iota {dimensions = array<i32: 1>} : vector<4x8xi32>
    %c4_i32 = arith.constant 4 : i32
    %14 = vector.broadcast %c4_i32 : i32 to vector<4x8xi32>
    %15 = arith.cmpi sge, %13, %14 : vector<4x8xi32>
    %c6_i32 = arith.constant 6 : i32
    %16 = vector.broadcast %c6_i32 : i32 to vector<4x8xi32>
    %17 = arith.cmpi slt, %13, %16 : vector<4x8xi32>
    %18 = arith.andi %15, %17 : vector<4x8xi1>
    %cst_8 = arith.constant 1.000000e+00 : f32
    %cst_9 = arith.constant 5.000000e-01 : f32
    %19 = vector.broadcast %cst_8 : f32 to vector<4x8xf32>
    %20 = vector.broadcast %cst_9 : f32 to vector<4x8xf32>
    %21 = arith.select %18, %19, %20 : vector<4x8xi1>, vector<4x8xf32>
    %cst_10 = arith.constant 0.000000e+00 : f32
    %cst_11 = arith.constant 5.000000e-01 : f32
    %22 = vector.broadcast %cst_10 : f32 to vector<4x8xf32>
    %23 = vector.broadcast %cst_11 : f32 to vector<4x8xf32>
    %24 = arith.select %18, %22, %23 : vector<4x8xi1>, vector<4x8xf32>
    %cst_12 = arith.constant 0.000000e+00 : f32
    %25 = vector.broadcast %cst_12 : f32 to vector<4x2xf32>
    %cst_13 = arith.constant 0.000000e+00 : f32
    %26 = vector.broadcast %cst_13 : f32 to vector<4x2xf32>
    %c50 = arith.constant 50 : index
    %c0_14 = arith.constant 0 : index
    %27 = vector.load %arg1[%c50, %c0_14] : memref<51x8xf32, #tpu.memory_space<vmem>>, vector<1x2xf32>
    %28 = vector.shape_cast %27 : vector<1x2xf32> to vector<1x2xf32>
    %29 = vector.broadcast %28 : vector<1x2xf32> to vector<4x2xf32>
    %c0_15 = arith.constant 0 : index
    %c0_16 = arith.constant 0 : index
    %30 = tpu.strided_load %arg3[%c0_15, %c0_16] {strides = array<i32: 15, 1>} : memref<60x8xf32, #tpu.memory_space<vmem>>, vector<4x8xf32>
    %31 = vector.extract_strided_slice %25 {offsets = [0, 0], sizes = [4, 1], strides = [1, 1]} : vector<4x2xf32> to vector<4x1xf32>
    %32 = vector.broadcast %31 : vector<4x1xf32> to vector<4x8xf32>
    %33 = arith.mulf %32, %9 : vector<4x8xf32>
    %34 = arith.addf %30, %33 : vector<4x8xf32>
    %35 = vector.extract_strided_slice %25 {offsets = [0, 1], sizes = [4, 1], strides = [1, 1]} : vector<4x2xf32> to vector<4x1xf32>
    %36 = vector.broadcast %35 : vector<4x1xf32> to vector<4x8xf32>
    %37 = arith.mulf %36, %12 : vector<4x8xf32>
    %38 = arith.addf %34, %37 : vector<4x8xf32>
    %39 = arith.mulf %38, %21 : vector<4x8xf32>
    %40 = math.tanh %39 : vector<4x8xf32>
    %41 = arith.mulf %40, %21 : vector<4x8xf32>
    %42 = arith.addf %41, %24 : vector<4x8xf32>
    %43 = vector.extract_strided_slice %42 {offsets = [0, 0], sizes = [4, 2], strides = [1, 1]} : vector<4x8xf32> to vector<4x2xf32>
    %44 = vector.extract_strided_slice %42 {offsets = [0, 2], sizes = [4, 2], strides = [1, 1]} : vector<4x8xf32> to vector<4x2xf32>
    %45 = vector.extract_strided_slice %42 {offsets = [0, 4], sizes = [4, 2], strides = [1, 1]} : vector<4x8xf32> to vector<4x2xf32>
    %46 = vector.extract_strided_slice %42 {offsets = [0, 6], sizes = [4, 2], strides = [1, 1]} : vector<4x8xf32> to vector<4x2xf32>
    %47 = arith.mulf %44, %26 : vector<4x2xf32>
    %48 = arith.mulf %43, %45 : vector<4x2xf32>
    %49 = arith.addf %47, %48 : vector<4x2xf32>
    %50 = math.tanh %49 : vector<4x2xf32>
    %51 = arith.mulf %46, %50 : vector<4x2xf32>
    %c35 = arith.constant 35 : index
    %c0_17 = arith.constant 0 : index
    %52 = vector.load %arg1[%c35, %c0_17] : memref<51x8xf32, #tpu.memory_space<vmem>>, vector<1x8xf32>
    %53 = vector.extract_strided_slice %51 {offsets = [0, 0], sizes = [4, 1], strides = [1, 1]} : vector<4x2xf32> to vector<4x1xf32>
    %54 = vector.extract_strided_slice %52 {offsets = [0, 0], sizes = [1, 2], strides = [1, 1]} : vector<1x8xf32> to vector<1x2xf32>
    %55 = vector.broadcast %53 : vector<4x1xf32> to vector<4x2xf32>
    %56 = vector.broadcast %54 : vector<1x2xf32> to vector<4x2xf32>
    %57 = arith.mulf %55, %56 : vector<4x2xf32>
    %58 = arith.addf %29, %57 : vector<4x2xf32>
    %59 = vector.extract_strided_slice %51 {offsets = [0, 1], sizes = [4, 1], strides = [1, 1]} : vector<4x2xf32> to vector<4x1xf32>
    %60 = vector.extract_strided_slice %52 {offsets = [0, 2], sizes = [1, 2], strides = [1, 1]} : vector<1x8xf32> to vector<1x2xf32>
    %61 = vector.broadcast %59 : vector<4x1xf32> to vector<4x2xf32>
    %62 = vector.broadcast %60 : vector<1x2xf32> to vector<4x2xf32>
    %63 = arith.mulf %61, %62 : vector<4x2xf32>
    %64 = arith.addf %58, %63 : vector<4x2xf32>
    %c1 = arith.constant 1 : index
    %c0_18 = arith.constant 0 : index
    %65 = tpu.strided_load %arg3[%c1, %c0_18] {strides = array<i32: 15, 1>} : memref<60x8xf32, #tpu.memory_space<vmem>>, vector<4x8xf32>
    %66 = vector.extract_strided_slice %51 {offsets = [0, 0], sizes = [4, 1], strides = [1, 1]} : vector<4x2xf32> to vector<4x1xf32>
    %67 = vector.broadcast %66 : vector<4x1xf32> to vector<4x8xf32>
    %68 = arith.mulf %67, %9 : vector<4x8xf32>
    %69 = arith.addf %65, %68 : vector<4x8xf32>
    %70 = vector.extract_strided_slice %51 {offsets = [0, 1], sizes = [4, 1], strides = [1, 1]} : vector<4x2xf32> to vector<4x1xf32>
    %71 = vector.broadcast %70 : vector<4x1xf32> to vector<4x8xf32>
    %72 = arith.mulf %71, %12 : vector<4x8xf32>
    %73 = arith.addf %69, %72 : vector<4x8xf32>
    %74 = arith.mulf %73, %21 : vector<4x8xf32>
    %75 = math.tanh %74 : vector<4x8xf32>
    %76 = arith.mulf %75, %21 : vector<4x8xf32>
    %77 = arith.addf %76, %24 : vector<4x8xf32>
    %78 = vector.extract_strided_slice %77 {offsets = [0, 0], sizes = [4, 2], strides = [1, 1]} : vector<4x8xf32> to vector<4x2xf32>
    %79 = vector.extract_strided_slice %77 {offsets = [0, 2], sizes = [4, 2], strides = [1, 1]} : vector<4x8xf32> to vector<4x2xf32>
    %80 = vector.extract_strided_slice %77 {offsets = [0, 4], sizes = [4, 2], strides = [1, 1]} : vector<4x8xf32> to vector<4x2xf32>
    %81 = vector.extract_strided_slice %77 {offsets = [0, 6], sizes = [4, 2], strides = [1, 1]} : vector<4x8xf32> to vector<4x2xf32>
    %82 = arith.mulf %79, %49 : vector<4x2xf32>
    %83 = arith.mulf %78, %80 : vector<4x2xf32>
    %84 = arith.addf %82, %83 : vector<4x2xf32>
    %85 = math.tanh %84 : vector<4x2xf32>
    %86 = arith.mulf %81, %85 : vector<4x2xf32>
    %c36 = arith.constant 36 : index
    %c0_19 = arith.constant 0 : index
    %87 = vector.load %arg1[%c36, %c0_19] : memref<51x8xf32, #tpu.memory_space<vmem>>, vector<1x8xf32>
    %88 = vector.extract_strided_slice %86 {offsets = [0, 0], sizes = [4, 1], strides = [1, 1]} : vector<4x2xf32> to vector<4x1xf32>
    %89 = vector.extract_strided_slice %87 {offsets = [0, 0], sizes = [1, 2], strides = [1, 1]} : vector<1x8xf32> to vector<1x2xf32>
    %90 = vector.broadcast %88 : vector<4x1xf32> to vector<4x2xf32>
    %91 = vector.broadcast %89 : vector<1x2xf32> to vector<4x2xf32>
    %92 = arith.mulf %90, %91 : vector<4x2xf32>
    %93 = arith.addf %64, %92 : vector<4x2xf32>
    %94 = vector.extract_strided_slice %86 {offsets = [0, 1], sizes = [4, 1], strides = [1, 1]} : vector<4x2xf32> to vector<4x1xf32>
    %95 = vector.extract_strided_slice %87 {offsets = [0, 2], sizes = [1, 2], strides = [1, 1]} : vector<1x8xf32> to vector<1x2xf32>
    %96 = vector.broadcast %94 : vector<4x1xf32> to vector<4x2xf32>
    %97 = vector.broadcast %95 : vector<1x2xf32> to vector<4x2xf32>
    %98 = arith.mulf %96, %97 : vector<4x2xf32>
    %99 = arith.addf %93, %98 : vector<4x2xf32>
    %c2 = arith.constant 2 : index
    %c0_20 = arith.constant 0 : index
    %100 = tpu.strided_load %arg3[%c2, %c0_20] {strides = array<i32: 15, 1>} : memref<60x8xf32, #tpu.memory_space<vmem>>, vector<4x8xf32>
    %101 = vector.extract_strided_slice %86 {offsets = [0, 0], sizes = [4, 1], strides = [1, 1]} : vector<4x2xf32> to vector<4x1xf32>
    %102 = vector.broadcast %101 : vector<4x1xf32> to vector<4x8xf32>
    %103 = arith.mulf %102, %9 : vector<4x8xf32>
    %104 = arith.addf %100, %103 : vector<4x8xf32>
    %105 = vector.extract_strided_slice %86 {offsets = [0, 1], sizes = [4, 1], strides = [1, 1]} : vector<4x2xf32> to vector<4x1xf32>
    %106 = vector.broadcast %105 : vector<4x1xf32> to vector<4x8xf32>
    %107 = arith.mulf %106, %12 : vector<4x8xf32>
    %108 = arith.addf %104, %107 : vector<4x8xf32>
    %109 = arith.mulf %108, %21 : vector<4x8xf32>
    %110 = math.tanh %109 : vector<4x8xf32>
    %111 = arith.mulf %110, %21 : vector<4x8xf32>
    %112 = arith.addf %111, %24 : vector<4x8xf32>
    %113 = vector.extract_strided_slice %112 {offsets = [0, 0], sizes = [4, 2], strides = [1, 1]} : vector<4x8xf32> to vector<4x2xf32>
    %114 = vector.extract_strided_slice %112 {offsets = [0, 2], sizes = [4, 2], strides = [1, 1]} : vector<4x8xf32> to vector<4x2xf32>
    %115 = vector.extract_strided_slice %112 {offsets = [0, 4], sizes = [4, 2], strides = [1, 1]} : vector<4x8xf32> to vector<4x2xf32>
    %116 = vector.extract_strided_slice %112 {offsets = [0, 6], sizes = [4, 2], strides = [1, 1]} : vector<4x8xf32> to vector<4x2xf32>
    %117 = arith.mulf %114, %84 : vector<4x2xf32>
    %118 = arith.mulf %113, %115 : vector<4x2xf32>
    %119 = arith.addf %117, %118 : vector<4x2xf32>
    %120 = math.tanh %119 : vector<4x2xf32>
    %121 = arith.mulf %116, %120 : vector<4x2xf32>
    %c37 = arith.constant 37 : index
    %c0_21 = arith.constant 0 : index
    %122 = vector.load %arg1[%c37, %c0_21] : memref<51x8xf32, #tpu.memory_space<vmem>>, vector<1x8xf32>
    %123 = vector.extract_strided_slice %121 {offsets = [0, 0], sizes = [4, 1], strides = [1, 1]} : vector<4x2xf32> to vector<4x1xf32>
    %124 = vector.extract_strided_slice %122 {offsets = [0, 0], sizes = [1, 2], strides = [1, 1]} : vector<1x8xf32> to vector<1x2xf32>
    %125 = vector.broadcast %123 : vector<4x1xf32> to vector<4x2xf32>
    %126 = vector.broadcast %124 : vector<1x2xf32> to vector<4x2xf32>
    %127 = arith.mulf %125, %126 : vector<4x2xf32>
    %128 = arith.addf %99, %127 : vector<4x2xf32>
    %129 = vector.extract_strided_slice %121 {offsets = [0, 1], sizes = [4, 1], strides = [1, 1]} : vector<4x2xf32> to vector<4x1xf32>
    %130 = vector.extract_strided_slice %122 {offsets = [0, 2], sizes = [1, 2], strides = [1, 1]} : vector<1x8xf32> to vector<1x2xf32>
    %131 = vector.broadcast %129 : vector<4x1xf32> to vector<4x2xf32>
    %132 = vector.broadcast %130 : vector<1x2xf32> to vector<4x2xf32>
    %133 = arith.mulf %131, %132 : vector<4x2xf32>
    %134 = arith.addf %128, %133 : vector<4x2xf32>
    %c3 = arith.constant 3 : index
    %c0_22 = arith.constant 0 : index
    %135 = tpu.strided_load %arg3[%c3, %c0_22] {strides = array<i32: 15, 1>} : memref<60x8xf32, #tpu.memory_space<vmem>>, vector<4x8xf32>
    %136 = vector.extract_strided_slice %121 {offsets = [0, 0], sizes = [4, 1], strides = [1, 1]} : vector<4x2xf32> to vector<4x1xf32>
    %137 = vector.broadcast %136 : vector<4x1xf32> to vector<4x8xf32>
    %138 = arith.mulf %137, %9 : vector<4x8xf32>
    %139 = arith.addf %135, %138 : vector<4x8xf32>
    %140 = vector.extract_strided_slice %121 {offsets = [0, 1], sizes = [4, 1], strides = [1, 1]} : vector<4x2xf32> to vector<4x1xf32>
    %141 = vector.broadcast %140 : vector<4x1xf32> to vector<4x8xf32>
    %142 = arith.mulf %141, %12 : vector<4x8xf32>
    %143 = arith.addf %139, %142 : vector<4x8xf32>
    %144 = arith.mulf %143, %21 : vector<4x8xf32>
    %145 = math.tanh %144 : vector<4x8xf32>
    %146 = arith.mulf %145, %21 : vector<4x8xf32>
    %147 = arith.addf %146, %24 : vector<4x8xf32>
    %148 = vector.extract_strided_slice %147 {offsets = [0, 0], sizes = [4, 2], strides = [1, 1]} : vector<4x8xf32> to vector<4x2xf32>
    %149 = vector.extract_strided_slice %147 {offsets = [0, 2], sizes = [4, 2], strides = [1, 1]} : vector<4x8xf32> to vector<4x2xf32>
    %150 = vector.extract_strided_slice %147 {offsets = [0, 4], sizes = [4, 2], strides = [1, 1]} : vector<4x8xf32> to vector<4x2xf32>
    %151 = vector.extract_strided_slice %147 {offsets = [0, 6], sizes = [4, 2], strides = [1, 1]} : vector<4x8xf32> to vector<4x2xf32>
    %152 = arith.mulf %149, %119 : vector<4x2xf32>
    %153 = arith.mulf %148, %150 : vector<4x2xf32>
    %154 = arith.addf %152, %153 : vector<4x2xf32>
    %155 = math.tanh %154 : vector<4x2xf32>
    %156 = arith.mulf %151, %155 : vector<4x2xf32>
    %c38 = arith.constant 38 : index
    %c0_23 = arith.constant 0 : index
    %157 = vector.load %arg1[%c38, %c0_23] : memref<51x8xf32, #tpu.memory_space<vmem>>, vector<1x8xf32>
    %158 = vector.extract_strided_slice %156 {offsets = [0, 0], sizes = [4, 1], strides = [1, 1]} : vector<4x2xf32> to vector<4x1xf32>
    %159 = vector.extract_strided_slice %157 {offsets = [0, 0], sizes = [1, 2], strides = [1, 1]} : vector<1x8xf32> to vector<1x2xf32>
    %160 = vector.broadcast %158 : vector<4x1xf32> to vector<4x2xf32>
    %161 = vector.broadcast %159 : vector<1x2xf32> to vector<4x2xf32>
    %162 = arith.mulf %160, %161 : vector<4x2xf32>
    %163 = arith.addf %134, %162 : vector<4x2xf32>
    %164 = vector.extract_strided_slice %156 {offsets = [0, 1], sizes = [4, 1], strides = [1, 1]} : vector<4x2xf32> to vector<4x1xf32>
    %165 = vector.extract_strided_slice %157 {offsets = [0, 2], sizes = [1, 2], strides = [1, 1]} : vector<1x8xf32> to vector<1x2xf32>
    %166 = vector.broadcast %164 : vector<4x1xf32> to vector<4x2xf32>
    %167 = vector.broadcast %165 : vector<1x2xf32> to vector<4x2xf32>
    %168 = arith.mulf %166, %167 : vector<4x2xf32>
    %169 = arith.addf %163, %168 : vector<4x2xf32>
    %c4 = arith.constant 4 : index
    %c0_24 = arith.constant 0 : index
    %170 = tpu.strided_load %arg3[%c4, %c0_24] {strides = array<i32: 15, 1>} : memref<60x8xf32, #tpu.memory_space<vmem>>, vector<4x8xf32>
    %171 = vector.extract_strided_slice %156 {offsets = [0, 0], sizes = [4, 1], strides = [1, 1]} : vector<4x2xf32> to vector<4x1xf32>
    %172 = vector.broadcast %171 : vector<4x1xf32> to vector<4x8xf32>
    %173 = arith.mulf %172, %9 : vector<4x8xf32>
    %174 = arith.addf %170, %173 : vector<4x8xf32>
    %175 = vector.extract_strided_slice %156 {offsets = [0, 1], sizes = [4, 1], strides = [1, 1]} : vector<4x2xf32> to vector<4x1xf32>
    %176 = vector.broadcast %175 : vector<4x1xf32> to vector<4x8xf32>
    %177 = arith.mulf %176, %12 : vector<4x8xf32>
    %178 = arith.addf %174, %177 : vector<4x8xf32>
    %179 = arith.mulf %178, %21 : vector<4x8xf32>
    %180 = math.tanh %179 : vector<4x8xf32>
    %181 = arith.mulf %180, %21 : vector<4x8xf32>
    %182 = arith.addf %181, %24 : vector<4x8xf32>
    %183 = vector.extract_strided_slice %182 {offsets = [0, 0], sizes = [4, 2], strides = [1, 1]} : vector<4x8xf32> to vector<4x2xf32>
    %184 = vector.extract_strided_slice %182 {offsets = [0, 2], sizes = [4, 2], strides = [1, 1]} : vector<4x8xf32> to vector<4x2xf32>
    %185 = vector.extract_strided_slice %182 {offsets = [0, 4], sizes = [4, 2], strides = [1, 1]} : vector<4x8xf32> to vector<4x2xf32>
    %186 = vector.extract_strided_slice %182 {offsets = [0, 6], sizes = [4, 2], strides = [1, 1]} : vector<4x8xf32> to vector<4x2xf32>
    %187 = arith.mulf %184, %154 : vector<4x2xf32>
    %188 = arith.mulf %183, %185 : vector<4x2xf32>
    %189 = arith.addf %187, %188 : vector<4x2xf32>
    %190 = math.tanh %189 : vector<4x2xf32>
    %191 = arith.mulf %186, %190 : vector<4x2xf32>
    %c39 = arith.constant 39 : index
    %c0_25 = arith.constant 0 : index
    %192 = vector.load %arg1[%c39, %c0_25] : memref<51x8xf32, #tpu.memory_space<vmem>>, vector<1x8xf32>
    %193 = vector.extract_strided_slice %191 {offsets = [0, 0], sizes = [4, 1], strides = [1, 1]} : vector<4x2xf32> to vector<4x1xf32>
    %194 = vector.extract_strided_slice %192 {offsets = [0, 0], sizes = [1, 2], strides = [1, 1]} : vector<1x8xf32> to vector<1x2xf32>
    %195 = vector.broadcast %193 : vector<4x1xf32> to vector<4x2xf32>
    %196 = vector.broadcast %194 : vector<1x2xf32> to vector<4x2xf32>
    %197 = arith.mulf %195, %196 : vector<4x2xf32>
    %198 = arith.addf %169, %197 : vector<4x2xf32>
    %199 = vector.extract_strided_slice %191 {offsets = [0, 1], sizes = [4, 1], strides = [1, 1]} : vector<4x2xf32> to vector<4x1xf32>
    %200 = vector.extract_strided_slice %192 {offsets = [0, 2], sizes = [1, 2], strides = [1, 1]} : vector<1x8xf32> to vector<1x2xf32>
    %201 = vector.broadcast %199 : vector<4x1xf32> to vector<4x2xf32>
    %202 = vector.broadcast %200 : vector<1x2xf32> to vector<4x2xf32>
    %203 = arith.mulf %201, %202 : vector<4x2xf32>
    %204 = arith.addf %198, %203 : vector<4x2xf32>
    %c5 = arith.constant 5 : index
    %c0_26 = arith.constant 0 : index
    %205 = tpu.strided_load %arg3[%c5, %c0_26] {strides = array<i32: 15, 1>} : memref<60x8xf32, #tpu.memory_space<vmem>>, vector<4x8xf32>
    %206 = vector.extract_strided_slice %191 {offsets = [0, 0], sizes = [4, 1], strides = [1, 1]} : vector<4x2xf32> to vector<4x1xf32>
    %207 = vector.broadcast %206 : vector<4x1xf32> to vector<4x8xf32>
    %208 = arith.mulf %207, %9 : vector<4x8xf32>
    %209 = arith.addf %205, %208 : vector<4x8xf32>
    %210 = vector.extract_strided_slice %191 {offsets = [0, 1], sizes = [4, 1], strides = [1, 1]} : vector<4x2xf32> to vector<4x1xf32>
    %211 = vector.broadcast %210 : vector<4x1xf32> to vector<4x8xf32>
    %212 = arith.mulf %211, %12 : vector<4x8xf32>
    %213 = arith.addf %209, %212 : vector<4x8xf32>
    %214 = arith.mulf %213, %21 : vector<4x8xf32>
    %215 = math.tanh %214 : vector<4x8xf32>
    %216 = arith.mulf %215, %21 : vector<4x8xf32>
    %217 = arith.addf %216, %24 : vector<4x8xf32>
    %218 = vector.extract_strided_slice %217 {offsets = [0, 0], sizes = [4, 2], strides = [1, 1]} : vector<4x8xf32> to vector<4x2xf32>
    %219 = vector.extract_strided_slice %217 {offsets = [0, 2], sizes = [4, 2], strides = [1, 1]} : vector<4x8xf32> to vector<4x2xf32>
    %220 = vector.extract_strided_slice %217 {offsets = [0, 4], sizes = [4, 2], strides = [1, 1]} : vector<4x8xf32> to vector<4x2xf32>
    %221 = vector.extract_strided_slice %217 {offsets = [0, 6], sizes = [4, 2], strides = [1, 1]} : vector<4x8xf32> to vector<4x2xf32>
    %222 = arith.mulf %219, %189 : vector<4x2xf32>
    %223 = arith.mulf %218, %220 : vector<4x2xf32>
    %224 = arith.addf %222, %223 : vector<4x2xf32>
    %225 = math.tanh %224 : vector<4x2xf32>
    %226 = arith.mulf %221, %225 : vector<4x2xf32>
    %c40 = arith.constant 40 : index
    %c0_27 = arith.constant 0 : index
    %227 = vector.load %arg1[%c40, %c0_27] : memref<51x8xf32, #tpu.memory_space<vmem>>, vector<1x8xf32>
    %228 = vector.extract_strided_slice %226 {offsets = [0, 0], sizes = [4, 1], strides = [1, 1]} : vector<4x2xf32> to vector<4x1xf32>
    %229 = vector.extract_strided_slice %227 {offsets = [0, 0], sizes = [1, 2], strides = [1, 1]} : vector<1x8xf32> to vector<1x2xf32>
    %230 = vector.broadcast %228 : vector<4x1xf32> to vector<4x2xf32>
    %231 = vector.broadcast %229 : vector<1x2xf32> to vector<4x2xf32>
    %232 = arith.mulf %230, %231 : vector<4x2xf32>
    %233 = arith.addf %204, %232 : vector<4x2xf32>
    %234 = vector.extract_strided_slice %226 {offsets = [0, 1], sizes = [4, 1], strides = [1, 1]} : vector<4x2xf32> to vector<4x1xf32>
    %235 = vector.extract_strided_slice %227 {offsets = [0, 2], sizes = [1, 2], strides = [1, 1]} : vector<1x8xf32> to vector<1x2xf32>
    %236 = vector.broadcast %234 : vector<4x1xf32> to vector<4x2xf32>
    %237 = vector.broadcast %235 : vector<1x2xf32> to vector<4x2xf32>
    %238 = arith.mulf %236, %237 : vector<4x2xf32>
    %239 = arith.addf %233, %238 : vector<4x2xf32>
    %c6 = arith.constant 6 : index
    %c0_28 = arith.constant 0 : index
    %240 = tpu.strided_load %arg3[%c6, %c0_28] {strides = array<i32: 15, 1>} : memref<60x8xf32, #tpu.memory_space<vmem>>, vector<4x8xf32>
    %241 = vector.extract_strided_slice %226 {offsets = [0, 0], sizes = [4, 1], strides = [1, 1]} : vector<4x2xf32> to vector<4x1xf32>
    %242 = vector.broadcast %241 : vector<4x1xf32> to vector<4x8xf32>
    %243 = arith.mulf %242, %9 : vector<4x8xf32>
    %244 = arith.addf %240, %243 : vector<4x8xf32>
    %245 = vector.extract_strided_slice %226 {offsets = [0, 1], sizes = [4, 1], strides = [1, 1]} : vector<4x2xf32> to vector<4x1xf32>
    %246 = vector.broadcast %245 : vector<4x1xf32> to vector<4x8xf32>
    %247 = arith.mulf %246, %12 : vector<4x8xf32>
    %248 = arith.addf %244, %247 : vector<4x8xf32>
    %249 = arith.mulf %248, %21 : vector<4x8xf32>
    %250 = math.tanh %249 : vector<4x8xf32>
    %251 = arith.mulf %250, %21 : vector<4x8xf32>
    %252 = arith.addf %251, %24 : vector<4x8xf32>
    %253 = vector.extract_strided_slice %252 {offsets = [0, 0], sizes = [4, 2], strides = [1, 1]} : vector<4x8xf32> to vector<4x2xf32>
    %254 = vector.extract_strided_slice %252 {offsets = [0, 2], sizes = [4, 2], strides = [1, 1]} : vector<4x8xf32> to vector<4x2xf32>
    %255 = vector.extract_strided_slice %252 {offsets = [0, 4], sizes = [4, 2], strides = [1, 1]} : vector<4x8xf32> to vector<4x2xf32>
    %256 = vector.extract_strided_slice %252 {offsets = [0, 6], sizes = [4, 2], strides = [1, 1]} : vector<4x8xf32> to vector<4x2xf32>
    %257 = arith.mulf %254, %224 : vector<4x2xf32>
    %258 = arith.mulf %253, %255 : vector<4x2xf32>
    %259 = arith.addf %257, %258 : vector<4x2xf32>
    %260 = math.tanh %259 : vector<4x2xf32>
    %261 = arith.mulf %256, %260 : vector<4x2xf32>
    %c41 = arith.constant 41 : index
    %c0_29 = arith.constant 0 : index
    %262 = vector.load %arg1[%c41, %c0_29] : memref<51x8xf32, #tpu.memory_space<vmem>>, vector<1x8xf32>
    %263 = vector.extract_strided_slice %261 {offsets = [0, 0], sizes = [4, 1], strides = [1, 1]} : vector<4x2xf32> to vector<4x1xf32>
    %264 = vector.extract_strided_slice %262 {offsets = [0, 0], sizes = [1, 2], strides = [1, 1]} : vector<1x8xf32> to vector<1x2xf32>
    %265 = vector.broadcast %263 : vector<4x1xf32> to vector<4x2xf32>
    %266 = vector.broadcast %264 : vector<1x2xf32> to vector<4x2xf32>
    %267 = arith.mulf %265, %266 : vector<4x2xf32>
    %268 = arith.addf %239, %267 : vector<4x2xf32>
    %269 = vector.extract_strided_slice %261 {offsets = [0, 1], sizes = [4, 1], strides = [1, 1]} : vector<4x2xf32> to vector<4x1xf32>
    %270 = vector.extract_strided_slice %262 {offsets = [0, 2], sizes = [1, 2], strides = [1, 1]} : vector<1x8xf32> to vector<1x2xf32>
    %271 = vector.broadcast %269 : vector<4x1xf32> to vector<4x2xf32>
    %272 = vector.broadcast %270 : vector<1x2xf32> to vector<4x2xf32>
    %273 = arith.mulf %271, %272 : vector<4x2xf32>
    %274 = arith.addf %268, %273 : vector<4x2xf32>
    %c7 = arith.constant 7 : index
    %c0_30 = arith.constant 0 : index
    %275 = tpu.strided_load %arg3[%c7, %c0_30] {strides = array<i32: 15, 1>} : memref<60x8xf32, #tpu.memory_space<vmem>>, vector<4x8xf32>
    %276 = vector.extract_strided_slice %261 {offsets = [0, 0], sizes = [4, 1], strides = [1, 1]} : vector<4x2xf32> to vector<4x1xf32>
    %277 = vector.broadcast %276 : vector<4x1xf32> to vector<4x8xf32>
    %278 = arith.mulf %277, %9 : vector<4x8xf32>
    %279 = arith.addf %275, %278 : vector<4x8xf32>
    %280 = vector.extract_strided_slice %261 {offsets = [0, 1], sizes = [4, 1], strides = [1, 1]} : vector<4x2xf32> to vector<4x1xf32>
    %281 = vector.broadcast %280 : vector<4x1xf32> to vector<4x8xf32>
    %282 = arith.mulf %281, %12 : vector<4x8xf32>
    %283 = arith.addf %279, %282 : vector<4x8xf32>
    %284 = arith.mulf %283, %21 : vector<4x8xf32>
    %285 = math.tanh %284 : vector<4x8xf32>
    %286 = arith.mulf %285, %21 : vector<4x8xf32>
    %287 = arith.addf %286, %24 : vector<4x8xf32>
    %288 = vector.extract_strided_slice %287 {offsets = [0, 0], sizes = [4, 2], strides = [1, 1]} : vector<4x8xf32> to vector<4x2xf32>
    %289 = vector.extract_strided_slice %287 {offsets = [0, 2], sizes = [4, 2], strides = [1, 1]} : vector<4x8xf32> to vector<4x2xf32>
    %290 = vector.extract_strided_slice %287 {offsets = [0, 4], sizes = [4, 2], strides = [1, 1]} : vector<4x8xf32> to vector<4x2xf32>
    %291 = vector.extract_strided_slice %287 {offsets = [0, 6], sizes = [4, 2], strides = [1, 1]} : vector<4x8xf32> to vector<4x2xf32>
    %292 = arith.mulf %289, %259 : vector<4x2xf32>
    %293 = arith.mulf %288, %290 : vector<4x2xf32>
    %294 = arith.addf %292, %293 : vector<4x2xf32>
    %295 = math.tanh %294 : vector<4x2xf32>
    %296 = arith.mulf %291, %295 : vector<4x2xf32>
    %c42 = arith.constant 42 : index
    %c0_31 = arith.constant 0 : index
    %297 = vector.load %arg1[%c42, %c0_31] : memref<51x8xf32, #tpu.memory_space<vmem>>, vector<1x8xf32>
    %298 = vector.extract_strided_slice %296 {offsets = [0, 0], sizes = [4, 1], strides = [1, 1]} : vector<4x2xf32> to vector<4x1xf32>
    %299 = vector.extract_strided_slice %297 {offsets = [0, 0], sizes = [1, 2], strides = [1, 1]} : vector<1x8xf32> to vector<1x2xf32>
    %300 = vector.broadcast %298 : vector<4x1xf32> to vector<4x2xf32>
    %301 = vector.broadcast %299 : vector<1x2xf32> to vector<4x2xf32>
    %302 = arith.mulf %300, %301 : vector<4x2xf32>
    %303 = arith.addf %274, %302 : vector<4x2xf32>
    %304 = vector.extract_strided_slice %296 {offsets = [0, 1], sizes = [4, 1], strides = [1, 1]} : vector<4x2xf32> to vector<4x1xf32>
    %305 = vector.extract_strided_slice %297 {offsets = [0, 2], sizes = [1, 2], strides = [1, 1]} : vector<1x8xf32> to vector<1x2xf32>
    %306 = vector.broadcast %304 : vector<4x1xf32> to vector<4x2xf32>
    %307 = vector.broadcast %305 : vector<1x2xf32> to vector<4x2xf32>
    %308 = arith.mulf %306, %307 : vector<4x2xf32>
    %309 = arith.addf %303, %308 : vector<4x2xf32>
    %c8 = arith.constant 8 : index
    %c0_32 = arith.constant 0 : index
    %310 = tpu.strided_load %arg3[%c8, %c0_32] {strides = array<i32: 15, 1>} : memref<60x8xf32, #tpu.memory_space<vmem>>, vector<4x8xf32>
    %311 = vector.extract_strided_slice %296 {offsets = [0, 0], sizes = [4, 1], strides = [1, 1]} : vector<4x2xf32> to vector<4x1xf32>
    %312 = vector.broadcast %311 : vector<4x1xf32> to vector<4x8xf32>
    %313 = arith.mulf %312, %9 : vector<4x8xf32>
    %314 = arith.addf %310, %313 : vector<4x8xf32>
    %315 = vector.extract_strided_slice %296 {offsets = [0, 1], sizes = [4, 1], strides = [1, 1]} : vector<4x2xf32> to vector<4x1xf32>
    %316 = vector.broadcast %315 : vector<4x1xf32> to vector<4x8xf32>
    %317 = arith.mulf %316, %12 : vector<4x8xf32>
    %318 = arith.addf %314, %317 : vector<4x8xf32>
    %319 = arith.mulf %318, %21 : vector<4x8xf32>
    %320 = math.tanh %319 : vector<4x8xf32>
    %321 = arith.mulf %320, %21 : vector<4x8xf32>
    %322 = arith.addf %321, %24 : vector<4x8xf32>
    %323 = vector.extract_strided_slice %322 {offsets = [0, 0], sizes = [4, 2], strides = [1, 1]} : vector<4x8xf32> to vector<4x2xf32>
    %324 = vector.extract_strided_slice %322 {offsets = [0, 2], sizes = [4, 2], strides = [1, 1]} : vector<4x8xf32> to vector<4x2xf32>
    %325 = vector.extract_strided_slice %322 {offsets = [0, 4], sizes = [4, 2], strides = [1, 1]} : vector<4x8xf32> to vector<4x2xf32>
    %326 = vector.extract_strided_slice %322 {offsets = [0, 6], sizes = [4, 2], strides = [1, 1]} : vector<4x8xf32> to vector<4x2xf32>
    %327 = arith.mulf %324, %294 : vector<4x2xf32>
    %328 = arith.mulf %323, %325 : vector<4x2xf32>
    %329 = arith.addf %327, %328 : vector<4x2xf32>
    %330 = math.tanh %329 : vector<4x2xf32>
    %331 = arith.mulf %326, %330 : vector<4x2xf32>
    %c43 = arith.constant 43 : index
    %c0_33 = arith.constant 0 : index
    %332 = vector.load %arg1[%c43, %c0_33] : memref<51x8xf32, #tpu.memory_space<vmem>>, vector<1x8xf32>
    %333 = vector.extract_strided_slice %331 {offsets = [0, 0], sizes = [4, 1], strides = [1, 1]} : vector<4x2xf32> to vector<4x1xf32>
    %334 = vector.extract_strided_slice %332 {offsets = [0, 0], sizes = [1, 2], strides = [1, 1]} : vector<1x8xf32> to vector<1x2xf32>
    %335 = vector.broadcast %333 : vector<4x1xf32> to vector<4x2xf32>
    %336 = vector.broadcast %334 : vector<1x2xf32> to vector<4x2xf32>
    %337 = arith.mulf %335, %336 : vector<4x2xf32>
    %338 = arith.addf %309, %337 : vector<4x2xf32>
    %339 = vector.extract_strided_slice %331 {offsets = [0, 1], sizes = [4, 1], strides = [1, 1]} : vector<4x2xf32> to vector<4x1xf32>
    %340 = vector.extract_strided_slice %332 {offsets = [0, 2], sizes = [1, 2], strides = [1, 1]} : vector<1x8xf32> to vector<1x2xf32>
    %341 = vector.broadcast %339 : vector<4x1xf32> to vector<4x2xf32>
    %342 = vector.broadcast %340 : vector<1x2xf32> to vector<4x2xf32>
    %343 = arith.mulf %341, %342 : vector<4x2xf32>
    %344 = arith.addf %338, %343 : vector<4x2xf32>
    %c9 = arith.constant 9 : index
    %c0_34 = arith.constant 0 : index
    %345 = tpu.strided_load %arg3[%c9, %c0_34] {strides = array<i32: 15, 1>} : memref<60x8xf32, #tpu.memory_space<vmem>>, vector<4x8xf32>
    %346 = vector.extract_strided_slice %331 {offsets = [0, 0], sizes = [4, 1], strides = [1, 1]} : vector<4x2xf32> to vector<4x1xf32>
    %347 = vector.broadcast %346 : vector<4x1xf32> to vector<4x8xf32>
    %348 = arith.mulf %347, %9 : vector<4x8xf32>
    %349 = arith.addf %345, %348 : vector<4x8xf32>
    %350 = vector.extract_strided_slice %331 {offsets = [0, 1], sizes = [4, 1], strides = [1, 1]} : vector<4x2xf32> to vector<4x1xf32>
    %351 = vector.broadcast %350 : vector<4x1xf32> to vector<4x8xf32>
    %352 = arith.mulf %351, %12 : vector<4x8xf32>
    %353 = arith.addf %349, %352 : vector<4x8xf32>
    %354 = arith.mulf %353, %21 : vector<4x8xf32>
    %355 = math.tanh %354 : vector<4x8xf32>
    %356 = arith.mulf %355, %21 : vector<4x8xf32>
    %357 = arith.addf %356, %24 : vector<4x8xf32>
    %358 = vector.extract_strided_slice %357 {offsets = [0, 0], sizes = [4, 2], strides = [1, 1]} : vector<4x8xf32> to vector<4x2xf32>
    %359 = vector.extract_strided_slice %357 {offsets = [0, 2], sizes = [4, 2], strides = [1, 1]} : vector<4x8xf32> to vector<4x2xf32>
    %360 = vector.extract_strided_slice %357 {offsets = [0, 4], sizes = [4, 2], strides = [1, 1]} : vector<4x8xf32> to vector<4x2xf32>
    %361 = vector.extract_strided_slice %357 {offsets = [0, 6], sizes = [4, 2], strides = [1, 1]} : vector<4x8xf32> to vector<4x2xf32>
    %362 = arith.mulf %359, %329 : vector<4x2xf32>
    %363 = arith.mulf %358, %360 : vector<4x2xf32>
    %364 = arith.addf %362, %363 : vector<4x2xf32>
    %365 = math.tanh %364 : vector<4x2xf32>
    %366 = arith.mulf %361, %365 : vector<4x2xf32>
    %c44 = arith.constant 44 : index
    %c0_35 = arith.constant 0 : index
    %367 = vector.load %arg1[%c44, %c0_35] : memref<51x8xf32, #tpu.memory_space<vmem>>, vector<1x8xf32>
    %368 = vector.extract_strided_slice %366 {offsets = [0, 0], sizes = [4, 1], strides = [1, 1]} : vector<4x2xf32> to vector<4x1xf32>
    %369 = vector.extract_strided_slice %367 {offsets = [0, 0], sizes = [1, 2], strides = [1, 1]} : vector<1x8xf32> to vector<1x2xf32>
    %370 = vector.broadcast %368 : vector<4x1xf32> to vector<4x2xf32>
    %371 = vector.broadcast %369 : vector<1x2xf32> to vector<4x2xf32>
    %372 = arith.mulf %370, %371 : vector<4x2xf32>
    %373 = arith.addf %344, %372 : vector<4x2xf32>
    %374 = vector.extract_strided_slice %366 {offsets = [0, 1], sizes = [4, 1], strides = [1, 1]} : vector<4x2xf32> to vector<4x1xf32>
    %375 = vector.extract_strided_slice %367 {offsets = [0, 2], sizes = [1, 2], strides = [1, 1]} : vector<1x8xf32> to vector<1x2xf32>
    %376 = vector.broadcast %374 : vector<4x1xf32> to vector<4x2xf32>
    %377 = vector.broadcast %375 : vector<1x2xf32> to vector<4x2xf32>
    %378 = arith.mulf %376, %377 : vector<4x2xf32>
    %379 = arith.addf %373, %378 : vector<4x2xf32>
    %c10 = arith.constant 10 : index
    %c0_36 = arith.constant 0 : index
    %380 = tpu.strided_load %arg3[%c10, %c0_36] {strides = array<i32: 15, 1>} : memref<60x8xf32, #tpu.memory_space<vmem>>, vector<4x8xf32>
    %381 = vector.extract_strided_slice %366 {offsets = [0, 0], sizes = [4, 1], strides = [1, 1]} : vector<4x2xf32> to vector<4x1xf32>
    %382 = vector.broadcast %381 : vector<4x1xf32> to vector<4x8xf32>
    %383 = arith.mulf %382, %9 : vector<4x8xf32>
    %384 = arith.addf %380, %383 : vector<4x8xf32>
    %385 = vector.extract_strided_slice %366 {offsets = [0, 1], sizes = [4, 1], strides = [1, 1]} : vector<4x2xf32> to vector<4x1xf32>
    %386 = vector.broadcast %385 : vector<4x1xf32> to vector<4x8xf32>
    %387 = arith.mulf %386, %12 : vector<4x8xf32>
    %388 = arith.addf %384, %387 : vector<4x8xf32>
    %389 = arith.mulf %388, %21 : vector<4x8xf32>
    %390 = math.tanh %389 : vector<4x8xf32>
    %391 = arith.mulf %390, %21 : vector<4x8xf32>
    %392 = arith.addf %391, %24 : vector<4x8xf32>
    %393 = vector.extract_strided_slice %392 {offsets = [0, 0], sizes = [4, 2], strides = [1, 1]} : vector<4x8xf32> to vector<4x2xf32>
    %394 = vector.extract_strided_slice %392 {offsets = [0, 2], sizes = [4, 2], strides = [1, 1]} : vector<4x8xf32> to vector<4x2xf32>
    %395 = vector.extract_strided_slice %392 {offsets = [0, 4], sizes = [4, 2], strides = [1, 1]} : vector<4x8xf32> to vector<4x2xf32>
    %396 = vector.extract_strided_slice %392 {offsets = [0, 6], sizes = [4, 2], strides = [1, 1]} : vector<4x8xf32> to vector<4x2xf32>
    %397 = arith.mulf %394, %364 : vector<4x2xf32>
    %398 = arith.mulf %393, %395 : vector<4x2xf32>
    %399 = arith.addf %397, %398 : vector<4x2xf32>
    %400 = math.tanh %399 : vector<4x2xf32>
    %401 = arith.mulf %396, %400 : vector<4x2xf32>
    %c45 = arith.constant 45 : index
    %c0_37 = arith.constant 0 : index
    %402 = vector.load %arg1[%c45, %c0_37] : memref<51x8xf32, #tpu.memory_space<vmem>>, vector<1x8xf32>
    %403 = vector.extract_strided_slice %401 {offsets = [0, 0], sizes = [4, 1], strides = [1, 1]} : vector<4x2xf32> to vector<4x1xf32>
    %404 = vector.extract_strided_slice %402 {offsets = [0, 0], sizes = [1, 2], strides = [1, 1]} : vector<1x8xf32> to vector<1x2xf32>
    %405 = vector.broadcast %403 : vector<4x1xf32> to vector<4x2xf32>
    %406 = vector.broadcast %404 : vector<1x2xf32> to vector<4x2xf32>
    %407 = arith.mulf %405, %406 : vector<4x2xf32>
    %408 = arith.addf %379, %407 : vector<4x2xf32>
    %409 = vector.extract_strided_slice %401 {offsets = [0, 1], sizes = [4, 1], strides = [1, 1]} : vector<4x2xf32> to vector<4x1xf32>
    %410 = vector.extract_strided_slice %402 {offsets = [0, 2], sizes = [1, 2], strides = [1, 1]} : vector<1x8xf32> to vector<1x2xf32>
    %411 = vector.broadcast %409 : vector<4x1xf32> to vector<4x2xf32>
    %412 = vector.broadcast %410 : vector<1x2xf32> to vector<4x2xf32>
    %413 = arith.mulf %411, %412 : vector<4x2xf32>
    %414 = arith.addf %408, %413 : vector<4x2xf32>
    %c11 = arith.constant 11 : index
    %c0_38 = arith.constant 0 : index
    %415 = tpu.strided_load %arg3[%c11, %c0_38] {strides = array<i32: 15, 1>} : memref<60x8xf32, #tpu.memory_space<vmem>>, vector<4x8xf32>
    %416 = vector.extract_strided_slice %401 {offsets = [0, 0], sizes = [4, 1], strides = [1, 1]} : vector<4x2xf32> to vector<4x1xf32>
    %417 = vector.broadcast %416 : vector<4x1xf32> to vector<4x8xf32>
    %418 = arith.mulf %417, %9 : vector<4x8xf32>
    %419 = arith.addf %415, %418 : vector<4x8xf32>
    %420 = vector.extract_strided_slice %401 {offsets = [0, 1], sizes = [4, 1], strides = [1, 1]} : vector<4x2xf32> to vector<4x1xf32>
    %421 = vector.broadcast %420 : vector<4x1xf32> to vector<4x8xf32>
    %422 = arith.mulf %421, %12 : vector<4x8xf32>
    %423 = arith.addf %419, %422 : vector<4x8xf32>
    %424 = arith.mulf %423, %21 : vector<4x8xf32>
    %425 = math.tanh %424 : vector<4x8xf32>
    %426 = arith.mulf %425, %21 : vector<4x8xf32>
    %427 = arith.addf %426, %24 : vector<4x8xf32>
    %428 = vector.extract_strided_slice %427 {offsets = [0, 0], sizes = [4, 2], strides = [1, 1]} : vector<4x8xf32> to vector<4x2xf32>
    %429 = vector.extract_strided_slice %427 {offsets = [0, 2], sizes = [4, 2], strides = [1, 1]} : vector<4x8xf32> to vector<4x2xf32>
    %430 = vector.extract_strided_slice %427 {offsets = [0, 4], sizes = [4, 2], strides = [1, 1]} : vector<4x8xf32> to vector<4x2xf32>
    %431 = vector.extract_strided_slice %427 {offsets = [0, 6], sizes = [4, 2], strides = [1, 1]} : vector<4x8xf32> to vector<4x2xf32>
    %432 = arith.mulf %429, %399 : vector<4x2xf32>
    %433 = arith.mulf %428, %430 : vector<4x2xf32>
    %434 = arith.addf %432, %433 : vector<4x2xf32>
    %435 = math.tanh %434 : vector<4x2xf32>
    %436 = arith.mulf %431, %435 : vector<4x2xf32>
    %c46 = arith.constant 46 : index
    %c0_39 = arith.constant 0 : index
    %437 = vector.load %arg1[%c46, %c0_39] : memref<51x8xf32, #tpu.memory_space<vmem>>, vector<1x8xf32>
    %438 = vector.extract_strided_slice %436 {offsets = [0, 0], sizes = [4, 1], strides = [1, 1]} : vector<4x2xf32> to vector<4x1xf32>
    %439 = vector.extract_strided_slice %437 {offsets = [0, 0], sizes = [1, 2], strides = [1, 1]} : vector<1x8xf32> to vector<1x2xf32>
    %440 = vector.broadcast %438 : vector<4x1xf32> to vector<4x2xf32>
    %441 = vector.broadcast %439 : vector<1x2xf32> to vector<4x2xf32>
    %442 = arith.mulf %440, %441 : vector<4x2xf32>
    %443 = arith.addf %414, %442 : vector<4x2xf32>
    %444 = vector.extract_strided_slice %436 {offsets = [0, 1], sizes = [4, 1], strides = [1, 1]} : vector<4x2xf32> to vector<4x1xf32>
    %445 = vector.extract_strided_slice %437 {offsets = [0, 2], sizes = [1, 2], strides = [1, 1]} : vector<1x8xf32> to vector<1x2xf32>
    %446 = vector.broadcast %444 : vector<4x1xf32> to vector<4x2xf32>
    %447 = vector.broadcast %445 : vector<1x2xf32> to vector<4x2xf32>
    %448 = arith.mulf %446, %447 : vector<4x2xf32>
    %449 = arith.addf %443, %448 : vector<4x2xf32>
    %c12 = arith.constant 12 : index
    %c0_40 = arith.constant 0 : index
    %450 = tpu.strided_load %arg3[%c12, %c0_40] {strides = array<i32: 15, 1>} : memref<60x8xf32, #tpu.memory_space<vmem>>, vector<4x8xf32>
    %451 = vector.extract_strided_slice %436 {offsets = [0, 0], sizes = [4, 1], strides = [1, 1]} : vector<4x2xf32> to vector<4x1xf32>
    %452 = vector.broadcast %451 : vector<4x1xf32> to vector<4x8xf32>
    %453 = arith.mulf %452, %9 : vector<4x8xf32>
    %454 = arith.addf %450, %453 : vector<4x8xf32>
    %455 = vector.extract_strided_slice %436 {offsets = [0, 1], sizes = [4, 1], strides = [1, 1]} : vector<4x2xf32> to vector<4x1xf32>
    %456 = vector.broadcast %455 : vector<4x1xf32> to vector<4x8xf32>
    %457 = arith.mulf %456, %12 : vector<4x8xf32>
    %458 = arith.addf %454, %457 : vector<4x8xf32>
    %459 = arith.mulf %458, %21 : vector<4x8xf32>
    %460 = math.tanh %459 : vector<4x8xf32>
    %461 = arith.mulf %460, %21 : vector<4x8xf32>
    %462 = arith.addf %461, %24 : vector<4x8xf32>
    %463 = vector.extract_strided_slice %462 {offsets = [0, 0], sizes = [4, 2], strides = [1, 1]} : vector<4x8xf32> to vector<4x2xf32>
    %464 = vector.extract_strided_slice %462 {offsets = [0, 2], sizes = [4, 2], strides = [1, 1]} : vector<4x8xf32> to vector<4x2xf32>
    %465 = vector.extract_strided_slice %462 {offsets = [0, 4], sizes = [4, 2], strides = [1, 1]} : vector<4x8xf32> to vector<4x2xf32>
    %466 = vector.extract_strided_slice %462 {offsets = [0, 6], sizes = [4, 2], strides = [1, 1]} : vector<4x8xf32> to vector<4x2xf32>
    %467 = arith.mulf %464, %434 : vector<4x2xf32>
    %468 = arith.mulf %463, %465 : vector<4x2xf32>
    %469 = arith.addf %467, %468 : vector<4x2xf32>
    %470 = math.tanh %469 : vector<4x2xf32>
    %471 = arith.mulf %466, %470 : vector<4x2xf32>
    %c47 = arith.constant 47 : index
    %c0_41 = arith.constant 0 : index
    %472 = vector.load %arg1[%c47, %c0_41] : memref<51x8xf32, #tpu.memory_space<vmem>>, vector<1x8xf32>
    %473 = vector.extract_strided_slice %471 {offsets = [0, 0], sizes = [4, 1], strides = [1, 1]} : vector<4x2xf32> to vector<4x1xf32>
    %474 = vector.extract_strided_slice %472 {offsets = [0, 0], sizes = [1, 2], strides = [1, 1]} : vector<1x8xf32> to vector<1x2xf32>
    %475 = vector.broadcast %473 : vector<4x1xf32> to vector<4x2xf32>
    %476 = vector.broadcast %474 : vector<1x2xf32> to vector<4x2xf32>
    %477 = arith.mulf %475, %476 : vector<4x2xf32>
    %478 = arith.addf %449, %477 : vector<4x2xf32>
    %479 = vector.extract_strided_slice %471 {offsets = [0, 1], sizes = [4, 1], strides = [1, 1]} : vector<4x2xf32> to vector<4x1xf32>
    %480 = vector.extract_strided_slice %472 {offsets = [0, 2], sizes = [1, 2], strides = [1, 1]} : vector<1x8xf32> to vector<1x2xf32>
    %481 = vector.broadcast %479 : vector<4x1xf32> to vector<4x2xf32>
    %482 = vector.broadcast %480 : vector<1x2xf32> to vector<4x2xf32>
    %483 = arith.mulf %481, %482 : vector<4x2xf32>
    %484 = arith.addf %478, %483 : vector<4x2xf32>
    %c13 = arith.constant 13 : index
    %c0_42 = arith.constant 0 : index
    %485 = tpu.strided_load %arg3[%c13, %c0_42] {strides = array<i32: 15, 1>} : memref<60x8xf32, #tpu.memory_space<vmem>>, vector<4x8xf32>
    %486 = vector.extract_strided_slice %471 {offsets = [0, 0], sizes = [4, 1], strides = [1, 1]} : vector<4x2xf32> to vector<4x1xf32>
    %487 = vector.broadcast %486 : vector<4x1xf32> to vector<4x8xf32>
    %488 = arith.mulf %487, %9 : vector<4x8xf32>
    %489 = arith.addf %485, %488 : vector<4x8xf32>
    %490 = vector.extract_strided_slice %471 {offsets = [0, 1], sizes = [4, 1], strides = [1, 1]} : vector<4x2xf32> to vector<4x1xf32>
    %491 = vector.broadcast %490 : vector<4x1xf32> to vector<4x8xf32>
    %492 = arith.mulf %491, %12 : vector<4x8xf32>
    %493 = arith.addf %489, %492 : vector<4x8xf32>
    %494 = arith.mulf %493, %21 : vector<4x8xf32>
    %495 = math.tanh %494 : vector<4x8xf32>
    %496 = arith.mulf %495, %21 : vector<4x8xf32>
    %497 = arith.addf %496, %24 : vector<4x8xf32>
    %498 = vector.extract_strided_slice %497 {offsets = [0, 0], sizes = [4, 2], strides = [1, 1]} : vector<4x8xf32> to vector<4x2xf32>
    %499 = vector.extract_strided_slice %497 {offsets = [0, 2], sizes = [4, 2], strides = [1, 1]} : vector<4x8xf32> to vector<4x2xf32>
    %500 = vector.extract_strided_slice %497 {offsets = [0, 4], sizes = [4, 2], strides = [1, 1]} : vector<4x8xf32> to vector<4x2xf32>
    %501 = vector.extract_strided_slice %497 {offsets = [0, 6], sizes = [4, 2], strides = [1, 1]} : vector<4x8xf32> to vector<4x2xf32>
    %502 = arith.mulf %499, %469 : vector<4x2xf32>
    %503 = arith.mulf %498, %500 : vector<4x2xf32>
    %504 = arith.addf %502, %503 : vector<4x2xf32>
    %505 = math.tanh %504 : vector<4x2xf32>
    %506 = arith.mulf %501, %505 : vector<4x2xf32>
    %c48 = arith.constant 48 : index
    %c0_43 = arith.constant 0 : index
    %507 = vector.load %arg1[%c48, %c0_43] : memref<51x8xf32, #tpu.memory_space<vmem>>, vector<1x8xf32>
    %508 = vector.extract_strided_slice %506 {offsets = [0, 0], sizes = [4, 1], strides = [1, 1]} : vector<4x2xf32> to vector<4x1xf32>
    %509 = vector.extract_strided_slice %507 {offsets = [0, 0], sizes = [1, 2], strides = [1, 1]} : vector<1x8xf32> to vector<1x2xf32>
    %510 = vector.broadcast %508 : vector<4x1xf32> to vector<4x2xf32>
    %511 = vector.broadcast %509 : vector<1x2xf32> to vector<4x2xf32>
    %512 = arith.mulf %510, %511 : vector<4x2xf32>
    %513 = arith.addf %484, %512 : vector<4x2xf32>
    %514 = vector.extract_strided_slice %506 {offsets = [0, 1], sizes = [4, 1], strides = [1, 1]} : vector<4x2xf32> to vector<4x1xf32>
    %515 = vector.extract_strided_slice %507 {offsets = [0, 2], sizes = [1, 2], strides = [1, 1]} : vector<1x8xf32> to vector<1x2xf32>
    %516 = vector.broadcast %514 : vector<4x1xf32> to vector<4x2xf32>
    %517 = vector.broadcast %515 : vector<1x2xf32> to vector<4x2xf32>
    %518 = arith.mulf %516, %517 : vector<4x2xf32>
    %519 = arith.addf %513, %518 : vector<4x2xf32>
    %c14 = arith.constant 14 : index
    %c0_44 = arith.constant 0 : index
    %520 = tpu.strided_load %arg3[%c14, %c0_44] {strides = array<i32: 15, 1>} : memref<60x8xf32, #tpu.memory_space<vmem>>, vector<4x8xf32>
    %521 = vector.extract_strided_slice %506 {offsets = [0, 0], sizes = [4, 1], strides = [1, 1]} : vector<4x2xf32> to vector<4x1xf32>
    %522 = vector.broadcast %521 : vector<4x1xf32> to vector<4x8xf32>
    %523 = arith.mulf %522, %9 : vector<4x8xf32>
    %524 = arith.addf %520, %523 : vector<4x8xf32>
    %525 = vector.extract_strided_slice %506 {offsets = [0, 1], sizes = [4, 1], strides = [1, 1]} : vector<4x2xf32> to vector<4x1xf32>
    %526 = vector.broadcast %525 : vector<4x1xf32> to vector<4x8xf32>
    %527 = arith.mulf %526, %12 : vector<4x8xf32>
    %528 = arith.addf %524, %527 : vector<4x8xf32>
    %529 = arith.mulf %528, %21 : vector<4x8xf32>
    %530 = math.tanh %529 : vector<4x8xf32>
    %531 = arith.mulf %530, %21 : vector<4x8xf32>
    %532 = arith.addf %531, %24 : vector<4x8xf32>
    %533 = vector.extract_strided_slice %532 {offsets = [0, 0], sizes = [4, 2], strides = [1, 1]} : vector<4x8xf32> to vector<4x2xf32>
    %534 = vector.extract_strided_slice %532 {offsets = [0, 2], sizes = [4, 2], strides = [1, 1]} : vector<4x8xf32> to vector<4x2xf32>
    %535 = vector.extract_strided_slice %532 {offsets = [0, 4], sizes = [4, 2], strides = [1, 1]} : vector<4x8xf32> to vector<4x2xf32>
    %536 = vector.extract_strided_slice %532 {offsets = [0, 6], sizes = [4, 2], strides = [1, 1]} : vector<4x8xf32> to vector<4x2xf32>
    %537 = arith.mulf %534, %504 : vector<4x2xf32>
    %538 = arith.mulf %533, %535 : vector<4x2xf32>
    %539 = arith.addf %537, %538 : vector<4x2xf32>
    %540 = math.tanh %539 : vector<4x2xf32>
    %541 = arith.mulf %536, %540 : vector<4x2xf32>
    %c49 = arith.constant 49 : index
    %c0_45 = arith.constant 0 : index
    %542 = vector.load %arg1[%c49, %c0_45] : memref<51x8xf32, #tpu.memory_space<vmem>>, vector<1x8xf32>
    %543 = vector.extract_strided_slice %541 {offsets = [0, 0], sizes = [4, 1], strides = [1, 1]} : vector<4x2xf32> to vector<4x1xf32>
    %544 = vector.extract_strided_slice %542 {offsets = [0, 0], sizes = [1, 2], strides = [1, 1]} : vector<1x8xf32> to vector<1x2xf32>
    %545 = vector.broadcast %543 : vector<4x1xf32> to vector<4x2xf32>
    %546 = vector.broadcast %544 : vector<1x2xf32> to vector<4x2xf32>
    %547 = arith.mulf %545, %546 : vector<4x2xf32>
    %548 = arith.addf %519, %547 : vector<4x2xf32>
    %549 = vector.extract_strided_slice %541 {offsets = [0, 1], sizes = [4, 1], strides = [1, 1]} : vector<4x2xf32> to vector<4x1xf32>
    %550 = vector.extract_strided_slice %542 {offsets = [0, 2], sizes = [1, 2], strides = [1, 1]} : vector<1x8xf32> to vector<1x2xf32>
    %551 = vector.broadcast %549 : vector<4x1xf32> to vector<4x2xf32>
    %552 = vector.broadcast %550 : vector<1x2xf32> to vector<4x2xf32>
    %553 = arith.mulf %551, %552 : vector<4x2xf32>
    %554 = arith.addf %548, %553 : vector<4x2xf32>
    %c0_46 = arith.constant 0 : index
    %c0_47 = arith.constant 0 : index
    %555 = vector.load %arg2[%c0_46, %c0_47] : memref<4x2xf32, #tpu.memory_space<vmem>>, vector<4x2xf32>
    tpu.vector_store %arg2[%c0_46, %c0_47], %554 {strides = array<i32>} : memref<4x2xf32, #tpu.memory_space<vmem>>, vector<4x2xf32>,
    return
  }
}

</mosaic_0001>

<llo_original>
// kernel: tpu_custom_call.1
$region0: #{tpu_custom_call.1}
  #allocation0 [shape = 'u32[]', space=smem, size = 0x4, offset = 0x4, fixed_abs, tag = 'smem constant byte address 0x4 - core index']
  #allocation1 [shape = 'u32[72,128]{1,0:T(1,128)}', space=vmem, size = 0x9000, scoped, tag = 'internal scratch']
  #allocation2 [shape = 'f32[60,8]{1,0:T(8,128)}', space=vmem, size = 0x8000, scoped, tag = 'scratch operand']
  %s0 = inlined_call_operand.vmem [shape: f32[60,32], index: 0, kind: input, shape index: {}]
  %s1 = inlined_call_operand.vmem [shape: f32[51,8], index: 1, kind: input, shape index: {}]
  %s2 = inlined_call_operand.vmem [shape: f32[4,2], index: 2, kind: output, shape index: {}]
  %s3 = sld [smem:[#allocation0]]
  $region18: #{tpu_custom_call.1} parent=0
    _
  %s5 = ssub.s32 1, %s3
  %s6 = scalar_select 0, %s5, %s3
  // Predicated region
  $region2: #{tpu_custom_call.1} parent=0 // pred_check
    _
  $region3: #{tpu_custom_call.1} parent=0 // pred_check_branch
    %8 = sbr.rel (0) target = $region5
  $region4: #{tpu_custom_call.1} parent=0 // pred_region
    _
  $region5: #{tpu_custom_call.1} parent=0 // pred_fallthru
    _
  // Predicated region
  $region6: #{tpu_custom_call.1} parent=0 // pred_check
    _
  $region7: #{tpu_custom_call.1} parent=0 // pred_check_branch
    %10 = sbr.rel (0) target = $region9
  $region8: #{tpu_custom_call.1} parent=0 // pred_region
    _
  $region9: #{tpu_custom_call.1} parent=0 // pred_fallthru
    _
  %v11 = vld [vmem:[%s0] sm:$0xff]
  %v12 = vld [vmem:[%s0 + $0x8] sm:$0xff]
  %v13 = vld [vmem:[%s0 + $0x10] sm:$0xff]
  %v14 = vld [vmem:[%s0 + $0x18] sm:$0xff]
  %v15 = vld [vmem:[%s0 + $0x20] sm:$0xff]
  %v16 = vld [vmem:[%s0 + $0x28] sm:$0xff]
  %v17 = vld [vmem:[%s0 + $0x30] sm:$0xff]
  %v18 = vld [vmem:[%s0 + $0x38] sm:$0xf]
  %v19 = vld [vmem:[%s1] sm:$0xff]
  %v20 = vld [vmem:[%s1 + $0x8] sm:$0xff]
  %v21 = vld [vmem:[%s1 + $0x10] sm:$0xff]
  %v22 = vld [vmem:[%s1 + $0x18] sm:$0xff]
  %v23 = vld [vmem:[%s1 + $0x20] sm:$0x1]
  %v24 = vperm.slane %v23, 0
  %vm25 = vcmask 261120
  %v27 = vsel %vm25, %v11, 0
  %v30 = vsel %vm25, %v12, 0
  %v33 = vsel %vm25, %v13, 0
  %v36 = vsel %vm25, %v14, 0
  %v39 = vsel %vm25, %v15, 0
  %v42 = vsel %vm25, %v16, 0
  %v45 = vsel %vm25, %v17, 0
  %v48 = vsel %vm25, %v18, 0
  %50 = vmatpush.msra.mxu0 0.0
  %51 = vmatpush.msra.mxu0 0.0
  %52 = vmatpush.msra.mxu0 0.0
  %53 = vmatpush.msra.mxu0 0.0
  %54 = vmatpush.msra.mxu0 0.0
  %55 = vmatpush.msra.mxu0 0.0
  %56 = vmatpush.msra.mxu0 0.0
  %57 = vmatpush.msra.mxu0 0.0
  %58 = vmatpush.msra.mxu0 0.0
  %59 = vmatpush.msra.mxu0 0.0
  %60 = vmatpush.msra.mxu0 0.0
  %61 = vmatpush.msra.mxu0 0.0
  %v62 = vand.u32 %v22, 4294901760
  %63 = vmatpush.msra.mxu0 %v62
  %v64 = vand.u32 %v21, 4294901760
  %65 = vmatpush.msra.mxu0 %v64
  %v66 = vand.u32 %v20, 4294901760
  %67 = vmatpush.msra.mxu0 %v66
  %v68 = vand.u32 %v19, 4294901760
  %69 = vmatpush.msra.mxu0 %v68
  %v70 = vand.u32 %v27, 4294901760
  %v71 = vsub.f32 %v27, %v70
  %v72 = vand.u32 %v71, 4294901760
  %v73 = vsub.f32 %v71, %v72
  %v74 = vand.u32 %v73, 4294901760
  %75 = vmatmul.f32.gmra.mxu0 %v74
  %v76 = vpop.f32.mrf.mxu0
  %v77 = vadd.f32 %v24, %v76
  %v78 = vand.u32 %v30, 4294901760
  %v79 = vsub.f32 %v30, %v78
  %v80 = vand.u32 %v79, 4294901760
  %v81 = vsub.f32 %v79, %v80
  %v82 = vand.u32 %v81, 4294901760
  %83 = vmatmul.f32.gmra.mxu0 %v82
  %v84 = vpop.f32.mrf.mxu0
  %v85 = vadd.f32 %v24, %v84
  %v86 = vand.u32 %v33, 4294901760
  %v87 = vsub.f32 %v33, %v86
  %v88 = vand.u32 %v87, 4294901760
  %v89 = vsub.f32 %v87, %v88
  %v90 = vand.u32 %v89, 4294901760
  %91 = vmatmul.f32.gmra.mxu0 %v90
  %v92 = vpop.f32.mrf.mxu0
  %v93 = vadd.f32 %v24, %v92
  %v94 = vand.u32 %v36, 4294901760
  %v95 = vsub.f32 %v36, %v94
  %v96 = vand.u32 %v95, 4294901760
  %v97 = vsub.f32 %v95, %v96
  %v98 = vand.u32 %v97, 4294901760
  %99 = vmatmul.f32.gmra.mxu0 %v98
  %v100 = vpop.f32.mrf.mxu0
  %v101 = vadd.f32 %v24, %v100
  %v102 = vand.u32 %v39, 4294901760
  %v103 = vsub.f32 %v39, %v102
  %v104 = vand.u32 %v103, 4294901760
  %v105 = vsub.f32 %v103, %v104
  %v106 = vand.u32 %v105, 4294901760
  %107 = vmatmul.f32.gmra.mxu0 %v106
  %v108 = vpop.f32.mrf.mxu0
  %v109 = vadd.f32 %v24, %v108
  %v110 = vand.u32 %v42, 4294901760
  %v111 = vsub.f32 %v42, %v110
  %v112 = vand.u32 %v111, 4294901760
  %v113 = vsub.f32 %v111, %v112
  %v114 = vand.u32 %v113, 4294901760
  %115 = vmatmul.f32.gmra.mxu0 %v114
  %v116 = vpop.f32.mrf.mxu0
  %v117 = vadd.f32 %v24, %v116
  %v118 = vand.u32 %v45, 4294901760
  %v119 = vsub.f32 %v45, %v118
  %v120 = vand.u32 %v119, 4294901760
  %v121 = vsub.f32 %v119, %v120
  %v122 = vand.u32 %v121, 4294901760
  %123 = vmatmul.f32.gmra.mxu0 %v122
  %v124 = vpop.f32.mrf.mxu0
  %v125 = vadd.f32 %v24, %v124
  %v126 = vand.u32 %v48, 4294901760
  %v127 = vsub.f32 %v48, %v126
  %v128 = vand.u32 %v127, 4294901760
  %v129 = vsub.f32 %v127, %v128
  %v130 = vand.u32 %v129, 4294901760
  %131 = vmatmul.f32.gmra.mxu0 %v130
  %v132 = vpop.f32.mrf.mxu0
  %v133 = vadd.f32 %v24, %v132
  %134 = vdwg.mxu0
  %135 = vmatpush.msra.mxu0 0.0
  %136 = vmatpush.msra.mxu0 0.0
  %137 = vmatpush.msra.mxu0 0.0
  %138 = vmatpush.msra.mxu0 0.0
  %139 = vmatpush.msra.mxu0 0.0
  %140 = vmatpush.msra.mxu0 0.0
  %141 = vmatpush.msra.mxu0 0.0
  %142 = vmatpush.msra.mxu0 0.0
  %143 = vmatpush.msra.mxu0 0.0
  %144 = vmatpush.msra.mxu0 0.0
  %145 = vmatpush.msra.mxu0 0.0
  %146 = vmatpush.msra.mxu0 0.0
  %v147 = vand.u32 %v22, 4294901760
  %v148 = vsub.f32 %v22, %v147
  %v149 = vand.u32 %v148, 4294901760
  %v150 = vsub.f32 %v148, %v149
  %v151 = vand.u32 %v150, 4294901760
  %152 = vmatpush.msra.mxu0 %v151
  %v153 = vand.u32 %v21, 4294901760
  %v154 = vsub.f32 %v21, %v153
  %v155 = vand.u32 %v154, 4294901760
  %v156 = vsub.f32 %v154, %v155
  %v157 = vand.u32 %v156, 4294901760
  %158 = vmatpush.msra.mxu0 %v157
  %v159 = vand.u32 %v20, 4294901760
  %v160 = vsub.f32 %v20, %v159
  %v161 = vand.u32 %v160, 4294901760
  %v162 = vsub.f32 %v160, %v161
  %v163 = vand.u32 %v162, 4294901760
  %164 = vmatpush.msra.mxu0 %v163
  %v165 = vand.u32 %v19, 4294901760
  %v166 = vsub.f32 %v19, %v165
  %v167 = vand.u32 %v166, 4294901760
  %v168 = vsub.f32 %v166, %v167
  %v169 = vand.u32 %v168, 4294901760
  %170 = vmatpush.msra.mxu0 %v169
  %v171 = vand.u32 %v27, 4294901760
  %172 = vmatmul.f32.gmra.mxu0 %v171
  %v173 = vpop.f32.mrf.mxu0
  %v174 = vadd.f32 %v77, %v173
  %v175 = vand.u32 %v30, 4294901760
  %176 = vmatmul.f32.gmra.mxu0 %v175
  %v177 = vpop.f32.mrf.mxu0
  %v178 = vadd.f32 %v85, %v177
  %v179 = vand.u32 %v33, 4294901760
  %180 = vmatmul.f32.gmra.mxu0 %v179
  %v181 = vpop.f32.mrf.mxu0
  %v182 = vadd.f32 %v93, %v181
  %v183 = vand.u32 %v36, 4294901760
  %184 = vmatmul.f32.gmra.mxu0 %v183
  %v185 = vpop.f32.mrf.mxu0
  %v186 = vadd.f32 %v101, %v185
  %v187 = vand.u32 %v39, 4294901760
  %188 = vmatmul.f32.gmra.mxu0 %v187
  %v189 = vpop.f32.mrf.mxu0
  %v190 = vadd.f32 %v109, %v189
  %v191 = vand.u32 %v42, 4294901760
  %192 = vmatmul.f32.gmra.mxu0 %v191
  %v193 = vpop.f32.mrf.mxu0
  %v194 = vadd.f32 %v117, %v193
  %v195 = vand.u32 %v45, 4294901760
  %196 = vmatmul.f32.gmra.mxu0 %v195
  %v197 = vpop.f32.mrf.mxu0
  %v198 = vadd.f32 %v125, %v197
  %v199 = vand.u32 %v48, 4294901760
  %200 = vmatmul.f32.gmra.mxu0 %v199
  %v201 = vpop.f32.mrf.mxu0
  %v202 = vadd.f32 %v133, %v201
  %203 = vdwg.mxu0
  %204 = vmatpush.msra.mxu0 0.0
  %205 = vmatpush.msra.mxu0 0.0
  %206 = vmatpush.msra.mxu0 0.0
  %207 = vmatpush.msra.mxu0 0.0
  %208 = vmatpush.msra.mxu0 0.0
  %209 = vmatpush.msra.mxu0 0.0
  %210 = vmatpush.msra.mxu0 0.0
  %211 = vmatpush.msra.mxu0 0.0
  %212 = vmatpush.msra.mxu0 0.0
  %213 = vmatpush.msra.mxu0 0.0
  %214 = vmatpush.msra.mxu0 0.0
  %215 = vmatpush.msra.mxu0 0.0
  %v216 = vand.u32 %v22, 4294901760
  %v217 = vsub.f32 %v22, %v216
  %218 = vmatpush.msra.mxu0 %v217
  %v219 = vand.u32 %v21, 4294901760
  %v220 = vsub.f32 %v21, %v219
  %221 = vmatpush.msra.mxu0 %v220
  %v222 = vand.u32 %v20, 4294901760
  %v223 = vsub.f32 %v20, %v222
  %224 = vmatpush.msra.mxu0 %v223
  %v225 = vand.u32 %v19, 4294901760
  %v226 = vsub.f32 %v19, %v225
  %227 = vmatpush.msra.mxu0 %v226
  %v228 = vand.u32 %v27, 4294901760
  %v229 = vsub.f32 %v27, %v228
  %230 = vmatmul.f32.gmra.mxu0 %v229
  %v231 = vpop.f32.mrf.mxu0
  %v232 = vadd.f32 %v174, %v231
  %v233 = vand.u32 %v30, 4294901760
  %v234 = vsub.f32 %v30, %v233
  %235 = vmatmul.f32.gmra.mxu0 %v234
  %v236 = vpop.f32.mrf.mxu0
  %v237 = vadd.f32 %v178, %v236
  %v238 = vand.u32 %v33, 4294901760
  %v239 = vsub.f32 %v33, %v238
  %240 = vmatmul.f32.gmra.mxu0 %v239
  %v241 = vpop.f32.mrf.mxu0
  %v242 = vadd.f32 %v182, %v241
  %v243 = vand.u32 %v36, 4294901760
  %v244 = vsub.f32 %v36, %v243
  %245 = vmatmul.f32.gmra.mxu0 %v244
  %v246 = vpop.f32.mrf.mxu0
  %v247 = vadd.f32 %v186, %v246
  %v248 = vand.u32 %v39, 4294901760
  %v249 = vsub.f32 %v39, %v248
  %250 = vmatmul.f32.gmra.mxu0 %v249
  %v251 = vpop.f32.mrf.mxu0
  %v252 = vadd.f32 %v190, %v251
  %v253 = vand.u32 %v42, 4294901760
  %v254 = vsub.f32 %v42, %v253
  %255 = vmatmul.f32.gmra.mxu0 %v254
  %v256 = vpop.f32.mrf.mxu0
  %v257 = vadd.f32 %v194, %v256
  %v258 = vand.u32 %v45, 4294901760
  %v259 = vsub.f32 %v45, %v258
  %260 = vmatmul.f32.gmra.mxu0 %v259
  %v261 = vpop.f32.mrf.mxu0
  %v262 = vadd.f32 %v198, %v261
  %v263 = vand.u32 %v48, 4294901760
  %v264 = vsub.f32 %v48, %v263
  %265 = vmatmul.f32.gmra.mxu0 %v264
  %v266 = vpop.f32.mrf.mxu0
  %v267 = vadd.f32 %v202, %v266
  %268 = vdwg.mxu0
  %269 = vmatpush.msra.mxu0 0.0
  %270 = vmatpush.msra.mxu0 0.0
  %271 = vmatpush.msra.mxu0 0.0
  %272 = vmatpush.msra.mxu0 0.0
  %273 = vmatpush.msra.mxu0 0.0
  %274 = vmatpush.msra.mxu0 0.0
  %275 = vmatpush.msra.mxu0 0.0
  %276 = vmatpush.msra.mxu0 0.0
  %277 = vmatpush.msra.mxu0 0.0
  %278 = vmatpush.msra.mxu0 0.0
  %279 = vmatpush.msra.mxu0 0.0
  %280 = vmatpush.msra.mxu0 0.0
  %v281 = vand.u32 %v22, 4294901760
  %282 = vmatpush.msra.mxu0 %v281
  %v283 = vand.u32 %v21, 4294901760
  %284 = vmatpush.msra.mxu0 %v283
  %v285 = vand.u32 %v20, 4294901760
  %286 = vmatpush.msra.mxu0 %v285
  %v287 = vand.u32 %v19, 4294901760
  %288 = vmatpush.msra.mxu0 %v287
  %v289 = vand.u32 %v27, 4294901760
  %v290 = vsub.f32 %v27, %v289
  %v291 = vand.u32 %v290, 4294901760
  %292 = vmatmul.f32.gmra.mxu0 %v291
  %v293 = vpop.f32.mrf.mxu0
  %v294 = vadd.f32 %v232, %v293
  %v295 = vand.u32 %v30, 4294901760
  %v296 = vsub.f32 %v30, %v295
  %v297 = vand.u32 %v296, 4294901760
  %298 = vmatmul.f32.gmra.mxu0 %v297
  %v299 = vpop.f32.mrf.mxu0
  %v300 = vadd.f32 %v237, %v299
  %v301 = vand.u32 %v33, 4294901760
  %v302 = vsub.f32 %v33, %v301
  %v303 = vand.u32 %v302, 4294901760
  %304 = vmatmul.f32.gmra.mxu0 %v303
  %v305 = vpop.f32.mrf.mxu0
  %v306 = vadd.f32 %v242, %v305
  %v307 = vand.u32 %v36, 4294901760
  %v308 = vsub.f32 %v36, %v307
  %v309 = vand.u32 %v308, 4294901760
  %310 = vmatmul.f32.gmra.mxu0 %v309
  %v311 = vpop.f32.mrf.mxu0
  %v312 = vadd.f32 %v247, %v311
  %v313 = vand.u32 %v39, 4294901760
  %v314 = vsub.f32 %v39, %v313
  %v315 = vand.u32 %v314, 4294901760
  %316 = vmatmul.f32.gmra.mxu0 %v315
  %v317 = vpop.f32.mrf.mxu0
  %v318 = vadd.f32 %v252, %v317
  %v319 = vand.u32 %v42, 4294901760
  %v320 = vsub.f32 %v42, %v319
  %v321 = vand.u32 %v320, 4294901760
  %322 = vmatmul.f32.gmra.mxu0 %v321
  %v323 = vpop.f32.mrf.mxu0
  %v324 = vadd.f32 %v257, %v323
  %v325 = vand.u32 %v45, 4294901760
  %v326 = vsub.f32 %v45, %v325
  %v327 = vand.u32 %v326, 4294901760
  %328 = vmatmul.f32.gmra.mxu0 %v327
  %v329 = vpop.f32.mrf.mxu0
  %v330 = vadd.f32 %v262, %v329
  %v331 = vand.u32 %v48, 4294901760
  %v332 = vsub.f32 %v48, %v331
  %v333 = vand.u32 %v332, 4294901760
  %334 = vmatmul.f32.gmra.mxu0 %v333
  %v335 = vpop.f32.mrf.mxu0
  %v336 = vadd.f32 %v267, %v335
  %337 = vdwg.mxu0
  %338 = vmatpush.msra.mxu0 0.0
  %339 = vmatpush.msra.mxu0 0.0
  %340 = vmatpush.msra.mxu0 0.0
  %341 = vmatpush.msra.mxu0 0.0
  %342 = vmatpush.msra.mxu0 0.0
  %343 = vmatpush.msra.mxu0 0.0
  %344 = vmatpush.msra.mxu0 0.0
  %345 = vmatpush.msra.mxu0 0.0
  %346 = vmatpush.msra.mxu0 0.0
  %347 = vmatpush.msra.mxu0 0.0
  %348 = vmatpush.msra.mxu0 0.0
  %349 = vmatpush.msra.mxu0 0.0
  %v350 = vand.u32 %v22, 4294901760
  %v351 = vsub.f32 %v22, %v350
  %v352 = vand.u32 %v351, 4294901760
  %353 = vmatpush.msra.mxu0 %v352
  %v354 = vand.u32 %v21, 4294901760
  %v355 = vsub.f32 %v21, %v354
  %v356 = vand.u32 %v355, 4294901760
  %357 = vmatpush.msra.mxu0 %v356
  %v358 = vand.u32 %v20, 4294901760
  %v359 = vsub.f32 %v20, %v358
  %v360 = vand.u32 %v359, 4294901760
  %361 = vmatpush.msra.mxu0 %v360
  %v362 = vand.u32 %v19, 4294901760
  %v363 = vsub.f32 %v19, %v362
  %v364 = vand.u32 %v363, 4294901760
  %365 = vmatpush.msra.mxu0 %v364
  %v366 = vand.u32 %v27, 4294901760
  %367 = vmatmul.f32.gmra.mxu0 %v366
  %v368 = vpop.f32.mrf.mxu0
  %v369 = vadd.f32 %v294, %v368
  %v370 = vand.u32 %v30, 4294901760
  %371 = vmatmul.f32.gmra.mxu0 %v370
  %v372 = vpop.f32.mrf.mxu0
  %v373 = vadd.f32 %v300, %v372
  %v374 = vand.u32 %v33, 4294901760
  %375 = vmatmul.f32.gmra.mxu0 %v374
  %v376 = vpop.f32.mrf.mxu0
  %v377 = vadd.f32 %v306, %v376
  %v378 = vand.u32 %v36, 4294901760
  %379 = vmatmul.f32.gmra.mxu0 %v378
  %v380 = vpop.f32.mrf.mxu0
  %v381 = vadd.f32 %v312, %v380
  %v382 = vand.u32 %v39, 4294901760
  %383 = vmatmul.f32.gmra.mxu0 %v382
  %v384 = vpop.f32.mrf.mxu0
  %v385 = vadd.f32 %v318, %v384
  %v386 = vand.u32 %v42, 4294901760
  %387 = vmatmul.f32.gmra.mxu0 %v386
  %v388 = vpop.f32.mrf.mxu0
  %v389 = vadd.f32 %v324, %v388
  %v390 = vand.u32 %v45, 4294901760
  %391 = vmatmul.f32.gmra.mxu0 %v390
  %v392 = vpop.f32.mrf.mxu0
  %v393 = vadd.f32 %v330, %v392
  %v394 = vand.u32 %v48, 4294901760
  %395 = vmatmul.f32.gmra.mxu0 %v394
  %v396 = vpop.f32.mrf.mxu0
  %v397 = vadd.f32 %v336, %v396
  %398 = vdwg.mxu0
  %399 = vmatpush.msra.mxu0 0.0
  %400 = vmatpush.msra.mxu0 0.0
  %401 = vmatpush.msra.mxu0 0.0
  %402 = vmatpush.msra.mxu0 0.0
  %403 = vmatpush.msra.mxu0 0.0
  %404 = vmatpush.msra.mxu0 0.0
  %405 = vmatpush.msra.mxu0 0.0
  %406 = vmatpush.msra.mxu0 0.0
  %407 = vmatpush.msra.mxu0 0.0
  %408 = vmatpush.msra.mxu0 0.0
  %409 = vmatpush.msra.mxu0 0.0
  %410 = vmatpush.msra.mxu0 0.0
  %v411 = vand.u32 %v22, 4294901760
  %412 = vmatpush.msra.mxu0 %v411
  %v413 = vand.u32 %v21, 4294901760
  %414 = vmatpush.msra.mxu0 %v413
  %v415 = vand.u32 %v20, 4294901760
  %416 = vmatpush.msra.mxu0 %v415
  %v417 = vand.u32 %v19, 4294901760
  %418 = vmatpush.msra.mxu0 %v417
  %v419 = vand.u32 %v27, 4294901760
  %420 = vmatmul.f32.gmra.mxu0 %v419
  %v421 = vpop.f32.mrf.mxu0
  %v422 = vadd.f32 %v369, %v421
  %v423 = vand.u32 %v30, 4294901760
  %424 = vmatmul.f32.gmra.mxu0 %v423
  %v425 = vpop.f32.mrf.mxu0
  %v426 = vadd.f32 %v373, %v425
  %v427 = vand.u32 %v33, 4294901760
  %428 = vmatmul.f32.gmra.mxu0 %v427
  %v429 = vpop.f32.mrf.mxu0
  %v430 = vadd.f32 %v377, %v429
  %v431 = vand.u32 %v36, 4294901760
  %432 = vmatmul.f32.gmra.mxu0 %v431
  %v433 = vpop.f32.mrf.mxu0
  %v434 = vadd.f32 %v381, %v433
  %v435 = vand.u32 %v39, 4294901760
  %436 = vmatmul.f32.gmra.mxu0 %v435
  %v437 = vpop.f32.mrf.mxu0
  %v438 = vadd.f32 %v385, %v437
  %v439 = vand.u32 %v42, 4294901760
  %440 = vmatmul.f32.gmra.mxu0 %v439
  %v441 = vpop.f32.mrf.mxu0
  %v442 = vadd.f32 %v389, %v441
  %v443 = vand.u32 %v45, 4294901760
  %444 = vmatmul.f32.gmra.mxu0 %v443
  %v445 = vpop.f32.mrf.mxu0
  %v446 = vadd.f32 %v393, %v445
  %v447 = vand.u32 %v48, 4294901760
  %448 = vmatmul.f32.gmra.mxu0 %v447
  %v449 = vpop.f32.mrf.mxu0
  %v450 = vadd.f32 %v397, %v449
  %451 = vdwg.mxu0
  %vm452 = vcmask 64512
  %453 = vst.msk [vmem:[#allocation2] sm:$0xff] %vm452, %v422
  %454 = vst.msk [vmem:[#allocation2 + $0x8] sm:$0xff] %vm452, %v426
  %455 = vst.msk [vmem:[#allocation2 + $0x10] sm:$0xff] %vm452, %v430
  %456 = vst.msk [vmem:[#allocation2 + $0x18] sm:$0xff] %vm452, %v434
  %457 = vst.msk [vmem:[#allocation2 + $0x20] sm:$0xff] %vm452, %v438
  %458 = vst.msk [vmem:[#allocation2 + $0x28] sm:$0xff] %vm452, %v442
  %459 = vst.msk [vmem:[#allocation2 + $0x30] sm:$0xff] %vm452, %v446
  %vm460 = vcmask 60416
  %461 = vst.msk [vmem:[#allocation2 + $0x38] sm:$0xf] %vm460, %v450
  %v462 = vld [vmem:[%s1 + $0x21] sm:$0x1]
  %v463 = vperm.slane %v462, 0
  %v464 = vld [vmem:[%s1 + $0x22] sm:$0x1]
  %v465 = vperm.slane %v464, 0
  %v466 = vlaneseq
  %v467 = vand.u32 %v466, 127
  %vm468 = vcmp.ge.s32.totalorder %v467, 4
  %vm469 = vcmp.lt.s32.totalorder %v467, 6
  %vm470 = vmand %vm468, %vm469
  %v471 = vsel %vm470, 1.0, 0.5
  %v472 = vsel %vm470, 0.0, 0.5
  %v473 = vld [vmem:[%s1 + $0x32] sm:$0x1]
  %v474 = vperm.slane %v473, 0
  %v475 = vld [vmem:[#allocation2] ss:$15 sm:$0xf]
  %v476 = vmul.f32 %v463, 0.0
  %v477 = vadd.f32 %v475, %v476
  %v478 = vmul.f32 %v465, 0.0
  %v479 = vadd.f32 %v477, %v478
  %v480 = vmul.f32 %v479, %v471
  %v481 = vtanh.pop %v480
  %v482 = vmul.f32 %v481, %v471
  %v483 = vadd.f32 %v482, %v472
  %v484 = vmul.f32 %v483, 0.0
  %486 = vrot.lane.b32.xlu0 %v483, 124
  %v487 = vpop.permute.xlu0 %486
  %v489 = vmul.f32 %v483, %v487
  %491 = vrot.lane.b32.xlu0 %v489, 2
  %v492 = vpop.permute.xlu0 %491
  %v494 = vadd.f32 %v484, %v492
  %v495 = vtanh.pop %v494
  %497 = vrot.lane.b32.xlu0 %v495, 4
  %v498 = vpop.permute.xlu0 %497
  %v500 = vmul.f32 %v483, %v498
  %v501 = vld [vmem:[%s1 + $0x23] sm:$0x1]
  %503 = vset.pattern.permute.xlu0 6
  %504 = vperm.xlu0 %503, %v500
  %v505 = vpop.permute.xlu0 %504
  %v507 = vperm.slane %v501, 0
  %v508 = vmul.f32 %v505, %v507
  %v509 = vadd.f32 %v474, %v508
  %510 = vset.pattern.permute.xlu0 7
  %511 = vperm.xlu0 %510, %v500
  %v512 = vpop.permute.xlu0 %511
  %v514 = vmul.f32 %v512, %v507
  %516 = vrot.lane.b32.xlu0 %v514, 126
  %v517 = vpop.permute.xlu0 %516
  %v519 = vadd.f32 %v509, %v517
  %s520 = scalar_lea.vmem [#allocation2], 1
  %v521 = vld [vmem:[%s520] ss:$15 sm:$0xf]
  %v522 = vmul.f32 %v505, %v463
  %v523 = vadd.f32 %v521, %v522
  %v524 = vmul.f32 %v512, %v465
  %v525 = vadd.f32 %v523, %v524
  %v526 = vmul.f32 %v525, %v471
  %v527 = vtanh.pop %v526
  %v528 = vmul.f32 %v527, %v471
  %v529 = vadd.f32 %v528, %v472
  %v530 = vmul.f32 %v529, %v494
  %532 = vrot.lane.b32.xlu0 %v529, 124
  %v533 = vpop.permute.xlu0 %532
  %v535 = vmul.f32 %v529, %v533
  %537 = vrot.lane.b32.xlu0 %v535, 2
  %v538 = vpop.permute.xlu0 %537
  %v540 = vadd.f32 %v530, %v538
  %v541 = vtanh.pop %v540
  %543 = vrot.lane.b32.xlu0 %v541, 4
  %v544 = vpop.permute.xlu0 %543
  %v546 = vmul.f32 %v529, %v544
  %v547 = vld [vmem:[%s1 + $0x24] sm:$0x1]
  %549 = vset.pattern.permute.xlu0 6
  %550 = vperm.xlu0 %549, %v546
  %v551 = vpop.permute.xlu0 %550
  %v553 = vperm.slane %v547, 0
  %v554 = vmul.f32 %v551, %v553
  %v555 = vadd.f32 %v519, %v554
  %556 = vset.pattern.permute.xlu0 7
  %557 = vperm.xlu0 %556, %v546
  %v558 = vpop.permute.xlu0 %557
  %v560 = vmul.f32 %v558, %v553
  %562 = vrot.lane.b32.xlu0 %v560, 126
  %v563 = vpop.permute.xlu0 %562
  %v565 = vadd.f32 %v555, %v563
  %s566 = scalar_lea.vmem [#allocation2], 2
  %v567 = vld [vmem:[%s566] ss:$15 sm:$0xf]
  %v568 = vmul.f32 %v551, %v463
  %v569 = vadd.f32 %v567, %v568
  %v570 = vmul.f32 %v558, %v465
  %v571 = vadd.f32 %v569, %v570
  %v572 = vmul.f32 %v571, %v471
  %v573 = vtanh.pop %v572
  %v574 = vmul.f32 %v573, %v471
  %v575 = vadd.f32 %v574, %v472
  %v576 = vmul.f32 %v575, %v540
  %578 = vrot.lane.b32.xlu0 %v575, 124
  %v579 = vpop.permute.xlu0 %578
  %v581 = vmul.f32 %v575, %v579
  %583 = vrot.lane.b32.xlu0 %v581, 2
  %v584 = vpop.permute.xlu0 %583
  %v586 = vadd.f32 %v576, %v584
  %v587 = vtanh.pop %v586
  %589 = vrot.lane.b32.xlu0 %v587, 4
  %v590 = vpop.permute.xlu0 %589
  %v592 = vmul.f32 %v575, %v590
  %v593 = vld [vmem:[%s1 + $0x25] sm:$0x1]
  %595 = vset.pattern.permute.xlu0 6
  %596 = vperm.xlu0 %595, %v592
  %v597 = vpop.permute.xlu0 %596
  %v599 = vperm.slane %v593, 0
  %v600 = vmul.f32 %v597, %v599
  %v601 = vadd.f32 %v565, %v600
  %602 = vset.pattern.permute.xlu0 7
  %603 = vperm.xlu0 %602, %v592
  %v604 = vpop.permute.xlu0 %603
  %v606 = vmul.f32 %v604, %v599
  %608 = vrot.lane.b32.xlu0 %v606, 126
  %v609 = vpop.permute.xlu0 %608
  %v611 = vadd.f32 %v601, %v609
  %s612 = scalar_lea.vmem [#allocation2], 3
  %v613 = vld [vmem:[%s612] ss:$15 sm:$0xf]
  %v614 = vmul.f32 %v597, %v463
  %v615 = vadd.f32 %v613, %v614
  %v616 = vmul.f32 %v604, %v465
  %v617 = vadd.f32 %v615, %v616
  %v618 = vmul.f32 %v617, %v471
  %v619 = vtanh.pop %v618
  %v620 = vmul.f32 %v619, %v471
  %v621 = vadd.f32 %v620, %v472
  %v622 = vmul.f32 %v621, %v586
  %624 = vrot.lane.b32.xlu0 %v621, 124
  %v625 = vpop.permute.xlu0 %624
  %v627 = vmul.f32 %v621, %v625
  %629 = vrot.lane.b32.xlu0 %v627, 2
  %v630 = vpop.permute.xlu0 %629
  %v632 = vadd.f32 %v622, %v630
  %v633 = vtanh.pop %v632
  %635 = vrot.lane.b32.xlu0 %v633, 4
  %v636 = vpop.permute.xlu0 %635
  %v638 = vmul.f32 %v621, %v636
  %v639 = vld [vmem:[%s1 + $0x26] sm:$0x1]
  %641 = vset.pattern.permute.xlu0 6
  %642 = vperm.xlu0 %641, %v638
  %v643 = vpop.permute.xlu0 %642
  %v645 = vperm.slane %v639, 0
  %v646 = vmul.f32 %v643, %v645
  %v647 = vadd.f32 %v611, %v646
  %648 = vset.pattern.permute.xlu0 7
  %649 = vperm.xlu0 %648, %v638
  %v650 = vpop.permute.xlu0 %649
  %v652 = vmul.f32 %v650, %v645
  %654 = vrot.lane.b32.xlu0 %v652, 126
  %v655 = vpop.permute.xlu0 %654
  %v657 = vadd.f32 %v647, %v655
  %s658 = scalar_lea.vmem [#allocation2], 4
  %v659 = vld [vmem:[%s658] ss:$15 sm:$0xf]
  %v660 = vmul.f32 %v643, %v463
  %v661 = vadd.f32 %v659, %v660
  %v662 = vmul.f32 %v650, %v465
  %v663 = vadd.f32 %v661, %v662
  %v664 = vmul.f32 %v663, %v471
  %v665 = vtanh.pop %v664
  %v666 = vmul.f32 %v665, %v471
  %v667 = vadd.f32 %v666, %v472
  %v668 = vmul.f32 %v667, %v632
  %670 = vrot.lane.b32.xlu0 %v667, 124
  %v671 = vpop.permute.xlu0 %670
  %v673 = vmul.f32 %v667, %v671
  %675 = vrot.lane.b32.xlu0 %v673, 2
  %v676 = vpop.permute.xlu0 %675
  %v678 = vadd.f32 %v668, %v676
  %v679 = vtanh.pop %v678
  %681 = vrot.lane.b32.xlu0 %v679, 4
  %v682 = vpop.permute.xlu0 %681
  %v684 = vmul.f32 %v667, %v682
  %v685 = vld [vmem:[%s1 + $0x27] sm:$0x1]
  %687 = vset.pattern.permute.xlu0 6
  %688 = vperm.xlu0 %687, %v684
  %v689 = vpop.permute.xlu0 %688
  %v691 = vperm.slane %v685, 0
  %v692 = vmul.f32 %v689, %v691
  %v693 = vadd.f32 %v657, %v692
  %694 = vset.pattern.permute.xlu0 7
  %695 = vperm.xlu0 %694, %v684
  %v696 = vpop.permute.xlu0 %695
  %v698 = vmul.f32 %v696, %v691
  %700 = vrot.lane.b32.xlu0 %v698, 126
  %v701 = vpop.permute.xlu0 %700
  %v703 = vadd.f32 %v693, %v701
  %s704 = scalar_lea.vmem [#allocation2], 5
  %v705 = vld [vmem:[%s704] ss:$15 sm:$0xf]
  %v706 = vmul.f32 %v689, %v463
  %v707 = vadd.f32 %v705, %v706
  %v708 = vmul.f32 %v696, %v465
  %v709 = vadd.f32 %v707, %v708
  %v710 = vmul.f32 %v709, %v471
  %v711 = vtanh.pop %v710
  %v712 = vmul.f32 %v711, %v471
  %v713 = vadd.f32 %v712, %v472
  %v714 = vmul.f32 %v713, %v678
  %716 = vrot.lane.b32.xlu0 %v713, 124
  %v717 = vpop.permute.xlu0 %716
  %v719 = vmul.f32 %v713, %v717
  %721 = vrot.lane.b32.xlu0 %v719, 2
  %v722 = vpop.permute.xlu0 %721
  %v724 = vadd.f32 %v714, %v722
  %v725 = vtanh.pop %v724
  %727 = vrot.lane.b32.xlu0 %v725, 4
  %v728 = vpop.permute.xlu0 %727
  %v730 = vmul.f32 %v713, %v728
  %v731 = vld [vmem:[%s1 + $0x28] sm:$0x1]
  %733 = vset.pattern.permute.xlu0 6
  %734 = vperm.xlu0 %733, %v730
  %v735 = vpop.permute.xlu0 %734
  %v737 = vperm.slane %v731, 0
  %v738 = vmul.f32 %v735, %v737
  %v739 = vadd.f32 %v703, %v738
  %740 = vset.pattern.permute.xlu0 7
  %741 = vperm.xlu0 %740, %v730
  %v742 = vpop.permute.xlu0 %741
  %v744 = vmul.f32 %v742, %v737
  %746 = vrot.lane.b32.xlu0 %v744, 126
  %v747 = vpop.permute.xlu0 %746
  %v749 = vadd.f32 %v739, %v747
  %s750 = scalar_lea.vmem [#allocation2], 6
  %v751 = vld [vmem:[%s750] ss:$15 sm:$0xf]
  %v752 = vmul.f32 %v735, %v463
  %v753 = vadd.f32 %v751, %v752
  %v754 = vmul.f32 %v742, %v465
  %v755 = vadd.f32 %v753, %v754
  %v756 = vmul.f32 %v755, %v471
  %v757 = vtanh.pop %v756
  %v758 = vmul.f32 %v757, %v471
  %v759 = vadd.f32 %v758, %v472
  %v760 = vmul.f32 %v759, %v724
  %762 = vrot.lane.b32.xlu0 %v759, 124
  %v763 = vpop.permute.xlu0 %762
  %v765 = vmul.f32 %v759, %v763
  %767 = vrot.lane.b32.xlu0 %v765, 2
  %v768 = vpop.permute.xlu0 %767
  %v770 = vadd.f32 %v760, %v768
  %v771 = vtanh.pop %v770
  %773 = vrot.lane.b32.xlu0 %v771, 4
  %v774 = vpop.permute.xlu0 %773
  %v776 = vmul.f32 %v759, %v774
  %v777 = vld [vmem:[%s1 + $0x29] sm:$0x1]
  %779 = vset.pattern.permute.xlu0 6
  %780 = vperm.xlu0 %779, %v776
  %v781 = vpop.permute.xlu0 %780
  %v783 = vperm.slane %v777, 0
  %v784 = vmul.f32 %v781, %v783
  %v785 = vadd.f32 %v749, %v784
  %786 = vset.pattern.permute.xlu0 7
  %787 = vperm.xlu0 %786, %v776
  %v788 = vpop.permute.xlu0 %787
  %v790 = vmul.f32 %v788, %v783
  %792 = vrot.lane.b32.xlu0 %v790, 126
  %v793 = vpop.permute.xlu0 %792
  %v795 = vadd.f32 %v785, %v793
  %s796 = scalar_lea.vmem [#allocation2], 7
  %v797 = vld [vmem:[%s796] ss:$15 sm:$0xf]
  %v798 = vmul.f32 %v781, %v463
  %v799 = vadd.f32 %v797, %v798
  %v800 = vmul.f32 %v788, %v465
  %v801 = vadd.f32 %v799, %v800
  %v802 = vmul.f32 %v801, %v471
  %v803 = vtanh.pop %v802
  %v804 = vmul.f32 %v803, %v471
  %v805 = vadd.f32 %v804, %v472
  %v806 = vmul.f32 %v805, %v770
  %808 = vrot.lane.b32.xlu0 %v805, 124
  %v809 = vpop.permute.xlu0 %808
  %v811 = vmul.f32 %v805, %v809
  %813 = vrot.lane.b32.xlu0 %v811, 2
  %v814 = vpop.permute.xlu0 %813
  %v816 = vadd.f32 %v806, %v814
  %v817 = vtanh.pop %v816
  %819 = vrot.lane.b32.xlu0 %v817, 4
  %v820 = vpop.permute.xlu0 %819
  %v822 = vmul.f32 %v805, %v820
  %v823 = vld [vmem:[%s1 + $0x2a] sm:$0x1]
  %825 = vset.pattern.permute.xlu0 6
  %826 = vperm.xlu0 %825, %v822
  %v827 = vpop.permute.xlu0 %826
  %v829 = vperm.slane %v823, 0
  %v830 = vmul.f32 %v827, %v829
  %v831 = vadd.f32 %v795, %v830
  %832 = vset.pattern.permute.xlu0 7
  %833 = vperm.xlu0 %832, %v822
  %v834 = vpop.permute.xlu0 %833
  %v836 = vmul.f32 %v834, %v829
  %838 = vrot.lane.b32.xlu0 %v836, 126
  %v839 = vpop.permute.xlu0 %838
  %v841 = vadd.f32 %v831, %v839
  %s842 = scalar_lea.vmem [#allocation2], 8
  %v843 = vld [vmem:[%s842] ss:$15 sm:$0xf]
  %v844 = vmul.f32 %v827, %v463
  %v845 = vadd.f32 %v843, %v844
  %v846 = vmul.f32 %v834, %v465
  %v847 = vadd.f32 %v845, %v846
  %v848 = vmul.f32 %v847, %v471
  %v849 = vtanh.pop %v848
  %v850 = vmul.f32 %v849, %v471
  %v851 = vadd.f32 %v850, %v472
  %v852 = vmul.f32 %v851, %v816
  %854 = vrot.lane.b32.xlu0 %v851, 124
  %v855 = vpop.permute.xlu0 %854
  %v857 = vmul.f32 %v851, %v855
  %859 = vrot.lane.b32.xlu0 %v857, 2
  %v860 = vpop.permute.xlu0 %859
  %v862 = vadd.f32 %v852, %v860
  %v863 = vtanh.pop %v862
  %865 = vrot.lane.b32.xlu0 %v863, 4
  %v866 = vpop.permute.xlu0 %865
  %v868 = vmul.f32 %v851, %v866
  %v869 = vld [vmem:[%s1 + $0x2b] sm:$0x1]
  %871 = vset.pattern.permute.xlu0 6
  %872 = vperm.xlu0 %871, %v868
  %v873 = vpop.permute.xlu0 %872
  %v875 = vperm.slane %v869, 0
  %v876 = vmul.f32 %v873, %v875
  %v877 = vadd.f32 %v841, %v876
  %878 = vset.pattern.permute.xlu0 7
  %879 = vperm.xlu0 %878, %v868
  %v880 = vpop.permute.xlu0 %879
  %v882 = vmul.f32 %v880, %v875
  %884 = vrot.lane.b32.xlu0 %v882, 126
  %v885 = vpop.permute.xlu0 %884
  %v887 = vadd.f32 %v877, %v885
  %s888 = scalar_lea.vmem [#allocation2], 9
  %v889 = vld [vmem:[%s888] ss:$15 sm:$0xf]
  %v890 = vmul.f32 %v873, %v463
  %v891 = vadd.f32 %v889, %v890
  %v892 = vmul.f32 %v880, %v465
  %v893 = vadd.f32 %v891, %v892
  %v894 = vmul.f32 %v893, %v471
  %v895 = vtanh.pop %v894
  %v896 = vmul.f32 %v895, %v471
  %v897 = vadd.f32 %v896, %v472
  %v898 = vmul.f32 %v897, %v862
  %900 = vrot.lane.b32.xlu0 %v897, 124
  %v901 = vpop.permute.xlu0 %900
  %v903 = vmul.f32 %v897, %v901
  %905 = vrot.lane.b32.xlu0 %v903, 2
  %v906 = vpop.permute.xlu0 %905
  %v908 = vadd.f32 %v898, %v906
  %v909 = vtanh.pop %v908
  %911 = vrot.lane.b32.xlu0 %v909, 4
  %v912 = vpop.permute.xlu0 %911
  %v914 = vmul.f32 %v897, %v912
  %v915 = vld [vmem:[%s1 + $0x2c] sm:$0x1]
  %917 = vset.pattern.permute.xlu0 6
  %918 = vperm.xlu0 %917, %v914
  %v919 = vpop.permute.xlu0 %918
  %v921 = vperm.slane %v915, 0
  %v922 = vmul.f32 %v919, %v921
  %v923 = vadd.f32 %v887, %v922
  %924 = vset.pattern.permute.xlu0 7
  %925 = vperm.xlu0 %924, %v914
  %v926 = vpop.permute.xlu0 %925
  %v928 = vmul.f32 %v926, %v921
  %930 = vrot.lane.b32.xlu0 %v928, 126
  %v931 = vpop.permute.xlu0 %930
  %v933 = vadd.f32 %v923, %v931
  %s934 = scalar_lea.vmem [#allocation2], 10
  %v935 = vld [vmem:[%s934] ss:$15 sm:$0xf]
  %v936 = vmul.f32 %v919, %v463
  %v937 = vadd.f32 %v935, %v936
  %v938 = vmul.f32 %v926, %v465
  %v939 = vadd.f32 %v937, %v938
  %v940 = vmul.f32 %v939, %v471
  %v941 = vtanh.pop %v940
  %v942 = vmul.f32 %v941, %v471
  %v943 = vadd.f32 %v942, %v472
  %v944 = vmul.f32 %v943, %v908
  %946 = vrot.lane.b32.xlu0 %v943, 124
  %v947 = vpop.permute.xlu0 %946
  %v949 = vmul.f32 %v943, %v947
  %951 = vrot.lane.b32.xlu0 %v949, 2
  %v952 = vpop.permute.xlu0 %951
  %v954 = vadd.f32 %v944, %v952
  %v955 = vtanh.pop %v954
  %957 = vrot.lane.b32.xlu0 %v955, 4
  %v958 = vpop.permute.xlu0 %957
  %v960 = vmul.f32 %v943, %v958
  %v961 = vld [vmem:[%s1 + $0x2d] sm:$0x1]
  %963 = vset.pattern.permute.xlu0 6
  %964 = vperm.xlu0 %963, %v960
  %v965 = vpop.permute.xlu0 %964
  %v967 = vperm.slane %v961, 0
  %v968 = vmul.f32 %v965, %v967
  %v969 = vadd.f32 %v933, %v968
  %970 = vset.pattern.permute.xlu0 7
  %971 = vperm.xlu0 %970, %v960
  %v972 = vpop.permute.xlu0 %971
  %v974 = vmul.f32 %v972, %v967
  %976 = vrot.lane.b32.xlu0 %v974, 126
  %v977 = vpop.permute.xlu0 %976
  %v979 = vadd.f32 %v969, %v977
  %s980 = scalar_lea.vmem [#allocation2], 11
  %v981 = vld [vmem:[%s980] ss:$15 sm:$0xf]
  %v982 = vmul.f32 %v965, %v463
  %v983 = vadd.f32 %v981, %v982
  %v984 = vmul.f32 %v972, %v465
  %v985 = vadd.f32 %v983, %v984
  %v986 = vmul.f32 %v985, %v471
  %v987 = vtanh.pop %v986
  %v988 = vmul.f32 %v987, %v471
  %v989 = vadd.f32 %v988, %v472
  %v990 = vmul.f32 %v989, %v954
  %992 = vrot.lane.b32.xlu0 %v989, 124
  %v993 = vpop.permute.xlu0 %992
  %v995 = vmul.f32 %v989, %v993
  %997 = vrot.lane.b32.xlu0 %v995, 2
  %v998 = vpop.permute.xlu0 %997
  %v1000 = vadd.f32 %v990, %v998
  %v1001 = vtanh.pop %v1000
  %1003 = vrot.lane.b32.xlu0 %v1001, 4
  %v1004 = vpop.permute.xlu0 %1003
  %v1006 = vmul.f32 %v989, %v1004
  %v1007 = vld [vmem:[%s1 + $0x2e] sm:$0x1]
  %1009 = vset.pattern.permute.xlu0 6
  %1010 = vperm.xlu0 %1009, %v1006
  %v1011 = vpop.permute.xlu0 %1010
  %v1013 = vperm.slane %v1007, 0
  %v1014 = vmul.f32 %v1011, %v1013
  %v1015 = vadd.f32 %v979, %v1014
  %1016 = vset.pattern.permute.xlu0 7
  %1017 = vperm.xlu0 %1016, %v1006
  %v1018 = vpop.permute.xlu0 %1017
  %v1020 = vmul.f32 %v1018, %v1013
  %1022 = vrot.lane.b32.xlu0 %v1020, 126
  %v1023 = vpop.permute.xlu0 %1022
  %v1025 = vadd.f32 %v1015, %v1023
  %s1026 = scalar_lea.vmem [#allocation2], 12
  %v1027 = vld [vmem:[%s1026] ss:$15 sm:$0xf]
  %v1028 = vmul.f32 %v1011, %v463
  %v1029 = vadd.f32 %v1027, %v1028
  %v1030 = vmul.f32 %v1018, %v465
  %v1031 = vadd.f32 %v1029, %v1030
  %v1032 = vmul.f32 %v1031, %v471
  %v1033 = vtanh.pop %v1032
  %v1034 = vmul.f32 %v1033, %v471
  %v1035 = vadd.f32 %v1034, %v472
  %v1036 = vmul.f32 %v1035, %v1000
  %1038 = vrot.lane.b32.xlu0 %v1035, 124
  %v1039 = vpop.permute.xlu0 %1038
  %v1041 = vmul.f32 %v1035, %v1039
  %1043 = vrot.lane.b32.xlu0 %v1041, 2
  %v1044 = vpop.permute.xlu0 %1043
  %v1046 = vadd.f32 %v1036, %v1044
  %v1047 = vtanh.pop %v1046
  %1049 = vrot.lane.b32.xlu0 %v1047, 4
  %v1050 = vpop.permute.xlu0 %1049
  %v1052 = vmul.f32 %v1035, %v1050
  %v1053 = vld [vmem:[%s1 + $0x2f] sm:$0x1]
  %1055 = vset.pattern.permute.xlu0 6
  %1056 = vperm.xlu0 %1055, %v1052
  %v1057 = vpop.permute.xlu0 %1056
  %v1059 = vperm.slane %v1053, 0
  %v1060 = vmul.f32 %v1057, %v1059
  %v1061 = vadd.f32 %v1025, %v1060
  %1062 = vset.pattern.permute.xlu0 7
  %1063 = vperm.xlu0 %1062, %v1052
  %v1064 = vpop.permute.xlu0 %1063
  %v1066 = vmul.f32 %v1064, %v1059
  %1068 = vrot.lane.b32.xlu0 %v1066, 126
  %v1069 = vpop.permute.xlu0 %1068
  %v1071 = vadd.f32 %v1061, %v1069
  %s1072 = scalar_lea.vmem [#allocation2], 13
  %v1073 = vld [vmem:[%s1072] ss:$15 sm:$0xf]
  %v1074 = vmul.f32 %v1057, %v463
  %v1075 = vadd.f32 %v1073, %v1074
  %v1076 = vmul.f32 %v1064, %v465
  %v1077 = vadd.f32 %v1075, %v1076
  %v1078 = vmul.f32 %v1077, %v471
  %v1079 = vtanh.pop %v1078
  %v1080 = vmul.f32 %v1079, %v471
  %v1081 = vadd.f32 %v1080, %v472
  %v1082 = vmul.f32 %v1081, %v1046
  %1084 = vrot.lane.b32.xlu0 %v1081, 124
  %v1085 = vpop.permute.xlu0 %1084
  %v1087 = vmul.f32 %v1081, %v1085
  %1089 = vrot.lane.b32.xlu0 %v1087, 2
  %v1090 = vpop.permute.xlu0 %1089
  %v1092 = vadd.f32 %v1082, %v1090
  %v1093 = vtanh.pop %v1092
  %1095 = vrot.lane.b32.xlu0 %v1093, 4
  %v1096 = vpop.permute.xlu0 %1095
  %v1098 = vmul.f32 %v1081, %v1096
  %v1099 = vld [vmem:[%s1 + $0x30] sm:$0x1]
  %1101 = vset.pattern.permute.xlu0 6
  %1102 = vperm.xlu0 %1101, %v1098
  %v1103 = vpop.permute.xlu0 %1102
  %v1105 = vperm.slane %v1099, 0
  %v1106 = vmul.f32 %v1103, %v1105
  %v1107 = vadd.f32 %v1071, %v1106
  %1108 = vset.pattern.permute.xlu0 7
  %1109 = vperm.xlu0 %1108, %v1098
  %v1110 = vpop.permute.xlu0 %1109
  %v1112 = vmul.f32 %v1110, %v1105
  %1114 = vrot.lane.b32.xlu0 %v1112, 126
  %v1115 = vpop.permute.xlu0 %1114
  %v1117 = vadd.f32 %v1107, %v1115
  %s1118 = scalar_lea.vmem [#allocation2], 14
  %v1119 = vld [vmem:[%s1118] ss:$15 sm:$0xf]
  %v1120 = vmul.f32 %v1103, %v463
  %v1121 = vadd.f32 %v1119, %v1120
  %v1122 = vmul.f32 %v1110, %v465
  %v1123 = vadd.f32 %v1121, %v1122
  %v1124 = vmul.f32 %v1123, %v471
  %v1125 = vtanh.pop %v1124
  %v1126 = vmul.f32 %v1125, %v471
  %v1127 = vadd.f32 %v1126, %v472
  %v1128 = vmul.f32 %v1127, %v1092
  %1130 = vrot.lane.b32.xlu0 %v1127, 124
  %v1131 = vpop.permute.xlu0 %1130
  %v1133 = vmul.f32 %v1127, %v1131
  %1135 = vrot.lane.b32.xlu0 %v1133, 2
  %v1136 = vpop.permute.xlu0 %1135
  %v1138 = vadd.f32 %v1128, %v1136
  %v1139 = vtanh.pop %v1138
  %1141 = vrot.lane.b32.xlu0 %v1139, 4
  %v1142 = vpop.permute.xlu0 %1141
  %v1144 = vmul.f32 %v1127, %v1142
  %v1145 = vld [vmem:[%s1 + $0x31] sm:$0x1]
  %1147 = vset.pattern.permute.xlu0 6
  %1148 = vperm.xlu0 %1147, %v1144
  %v1149 = vpop.permute.xlu0 %1148
  %v1151 = vperm.slane %v1145, 0
  %v1152 = vmul.f32 %v1149, %v1151
  %v1153 = vadd.f32 %v1117, %v1152
  %1154 = vset.pattern.permute.xlu0 7
  %1155 = vperm.xlu0 %1154, %v1144
  %v1156 = vpop.permute.xlu0 %1155
  %v1158 = vmul.f32 %v1156, %v1151
  %1160 = vrot.lane.b32.xlu0 %v1158, 126
  %v1161 = vpop.permute.xlu0 %1160
  %v1163 = vadd.f32 %v1153, %v1161
  %vm1164 = vcmask 11264
  %1165 = vst.msk [vmem:[%s2] sm:$0xf] %vm1164, %v1163
  // Predicated region
  $region10: #{tpu_custom_call.1} parent=0 // pred_check
    _
  $region11: #{tpu_custom_call.1} parent=0 // pred_check_branch
    %1167 = sbr.rel (0) target = $region13
  $region12: #{tpu_custom_call.1} parent=0 // pred_region
    _
  $region13: #{tpu_custom_call.1} parent=0 // pred_fallthru
    _
  // Predicated region
  $region14: #{tpu_custom_call.1} parent=0 // pred_check
    _
  $region15: #{tpu_custom_call.1} parent=0 // pred_check_branch
    %1169 = sbr.rel (0) target = $region17
  $region16: #{tpu_custom_call.1} parent=0 // pred_region
    _
  $region17: #{tpu_custom_call.1} parent=0 // pred_fallthru
    _

</llo_original>
